<compile_context>
chip_gen: v7x
topology: tpu7x:2x2x1
jax: 0.10.0
libtpu: 0.0.40
codegen_flags: <defaults>
</compile_context>

<pallas_src>
import math

import jax
import jax.numpy as jnp
from jax.experimental import pallas as pl
from jax.experimental.pallas import tpu as pltpu

HIDDEN = 32
NUM_HEADS = 4
HEAD_DIM = HIDDEN // NUM_HEADS


def _attn_weights_kernel(x_ref, wq_ref, wk_ref, bq_ref, bk_ref, mask_ref, attn_ref):
    # x_ref:    (G, S, E)  tokens, replicated per head   (G = B * NUM_HEADS)
    # wq/wk:    (G, E, D)  head-major projection weights (replicated per batch)
    # bq/bk:    (G, 1, D)  head-major projection biases
    # mask_ref: (G, 1, S)  additive key-padding bias (0 or -1e30)
    # attn_ref: (B, S, S)  head-averaged softmax attention weights
    x = x_ref[...]

    # Head-batched Q/K projections: one batched dot_general each — no lane
    # slicing of the projected activations.
    q = jnp.einsum("gse,ged->gsd", x, wq_ref[...],
                   preferred_element_type=jnp.float32) + bq_ref[...]
    k = jnp.einsum("gse,ged->gsd", x, wk_ref[...],
                   preferred_element_type=jnp.float32) + bk_ref[...]

    # Scores: contract the last dim of both operands (no explicit kh.T).
    s = jnp.einsum("gqd,gkd->gqk", q, k, preferred_element_type=jnp.float32)
    s = s * (1.0 / math.sqrt(HEAD_DIM)) + mask_ref[...]

    # Numerically stable softmax over keys.
    m = jnp.max(s, axis=-1, keepdims=True)
    p = jnp.exp(s - m)
    denom = jnp.sum(p, axis=-1, keepdims=True)
    inv = pl.reciprocal(denom, approx=True)   # EUP slot
    inv = inv * (2.0 - denom * inv)           # one Newton step -> ~f32 accuracy
    p = p * inv

    # Average over heads: (G, S, S) = (B, H, S, S) -> mean over H.  The
    # reshape only splits leading dims (minor (S, S) layout unchanged).
    g, sq, sk = p.shape
    p = p.reshape(g // NUM_HEADS, NUM_HEADS, sq, sk)
    attn_ref[...] = jnp.mean(p, axis=1).astype(attn_ref.dtype)


def multihead_self_att_head(x, in_proj_weight, in_proj_bias, attention_mask=None):
    """Returns (x, attn_weights), matching the PyTorch module's forward."""
    B, S, E = x.shape
    assert E == HIDDEN
    H, D = NUM_HEADS, HEAD_DIM
    G = B * H

    # PyTorch computes q = x @ in_proj_weight[:E].T + bias[:E], etc.
    # Re-lay the weights head-major: (H, E, D) so heads live on a leading dim.
    wq_h = in_proj_weight[:E].T.reshape(E, H, D).transpose(1, 0, 2)
    wk_h = in_proj_weight[E:2 * E].T.reshape(E, H, D).transpose(1, 0, 2)
    bq_h = in_proj_bias[:E].reshape(H, 1, D)
    bk_h = in_proj_bias[E:2 * E].reshape(H, 1, D)

    # Collapse (batch, head) -> G so a single kernel invocation (no grid)
    # handles everything.  These broadcasts are a few KiB of layout plumbing.
    x_g = jnp.broadcast_to(x[:, None], (B, H, S, E)).reshape(G, S, E)
    wq_g = jnp.broadcast_to(wq_h[None], (B, H, E, D)).reshape(G, E, D)
    wk_g = jnp.broadcast_to(wk_h[None], (B, H, E, D)).reshape(G, E, D)
    bq_g = jnp.broadcast_to(bq_h[None], (B, H, 1, D)).reshape(G, 1, D)
    bk_g = jnp.broadcast_to(bk_h[None], (B, H, 1, D)).reshape(G, 1, D)

    if attention_mask is None:
        mask_bias = jnp.zeros((B, 1, S), jnp.float32)
    else:
        mask_bias = jnp.where(attention_mask, -1e30, 0.0).astype(jnp.float32).reshape(B, 1, S)
    mask_g = jnp.broadcast_to(mask_bias[:, None], (B, H, 1, S)).reshape(G, 1, S)

    vmem = pl.BlockSpec(memory_space=pltpu.MemorySpace.VMEM)
    attn = pl.pallas_call(
        _attn_weights_kernel,
        out_shape=jax.ShapeDtypeStruct((B, S, S), jnp.float32),
        in_specs=[vmem] * 6,
        out_specs=vmem,
    )(x_g, wq_g, wk_g, bq_g, bk_g, mask_g)

    return x, attn


def _reference(x, in_proj_weight, in_proj_bias, attention_mask=None):
    """Pure-JAX replica of nn.MultiheadAttention's averaged attn weights."""
    B, S, E = x.shape
    wq, wk = in_proj_weight[:E], in_proj_weight[E:2 * E]
    bq, bk = in_proj_bias[:E], in_proj_bias[E:2 * E]
    q = (x @ wq.T + bq).reshape(B, S, NUM_HEADS, HEAD_DIM).transpose(0, 2, 1, 3)
    k = (x @ wk.T + bk).reshape(B, S, NUM_HEADS, HEAD_DIM).transpose(0, 2, 1, 3)
    s = jnp.einsum("bhqd,bhkd->bhqk", q, k) / math.sqrt(HEAD_DIM)
    if attention_mask is not None:
        s = s + jnp.where(attention_mask, -jnp.inf, 0.0)[:, None, None, :]
    p = jax.nn.softmax(s, axis=-1)
    return p.mean(axis=1)  # head-averaged -> (B, S, S)


if __name__ == "__main__":
    B, S, E = 2, 8, HIDDEN
    key = jax.random.PRNGKey(0)
    kx, kw, kb = jax.random.split(key, 3)

    x = jax.random.normal(kx, (B, S, E), dtype=jnp.float32)
    # nn.MultiheadAttention init is xavier_uniform_ weights / zero bias; use a
    # small random bias here so the bias path is actually exercised.
    bound = math.sqrt(6.0 / (3 * E + E))
    in_proj_weight = jax.random.uniform(
        kw, (3 * E, E), dtype=jnp.float32, minval=-bound, maxval=bound)
    in_proj_bias = 0.1 * jax.random.normal(kb, (3 * E,), dtype=jnp.float32)

    # Case 1: no key-padding mask.
    out_x, attn = multihead_self_att_head(x, in_proj_weight, in_proj_bias, None)
    jax.block_until_ready(attn)
    ref = _reference(x, in_proj_weight, in_proj_bias, None)
    assert out_x.shape == (B, S, E)
    assert attn.shape == (B, S, S)
    assert jnp.allclose(out_x, x)
    assert jnp.allclose(attn, ref, atol=1e-4, rtol=1e-4)
    assert jnp.allclose(attn.sum(-1), 1.0, atol=1e-4)

    # Case 2: key-padding mask (last two keys of batch 1 masked out).
    mask = jnp.zeros((B, S), dtype=bool).at[1, -2:].set(True)
    _, attn_m = multihead_self_att_head(x, in_proj_weight, in_proj_bias, mask)
    jax.block_until_ready(attn_m)
    ref_m = _reference(x, in_proj_weight, in_proj_bias, mask)
    assert jnp.allclose(attn_m, ref_m, atol=1e-4, rtol=1e-4)
    assert jnp.allclose(attn_m[1, :, -2:], 0.0, atol=1e-6)

    print("KERNEL_OK")
</pallas_src>

<mosaic_0001>
module attributes {stable_mosaic.version = 11 : i64} {
  func.func @_attn_weights_kernel(%arg0: memref<8x8x32xf32, #tpu.memory_space<vmem>>, %arg1: memref<8x32x8xf32, #tpu.memory_space<vmem>>, %arg2: memref<8x32x8xf32, #tpu.memory_space<vmem>>, %arg3: memref<8x1x8xf32, #tpu.memory_space<vmem>>, %arg4: memref<8x1x8xf32, #tpu.memory_space<vmem>>, %arg5: memref<8x1x8xf32, #tpu.memory_space<vmem>>, %arg6: memref<2x8x8xf32, #tpu.memory_space<vmem>>) attributes {dimension_semantics = [], scalar_prefetch = 0 : i64, scratch_operands = 0 : i64, tpu.core_type = #tpu.core_type<tc>} {
    %c0 = arith.constant 0 : index
    %c0_0 = arith.constant 0 : index
    %c0_1 = arith.constant 0 : index
    %0 = vector.load %arg0[%c0, %c0_0, %c0_1] : memref<8x8x32xf32, #tpu.memory_space<vmem>>, vector<8x8x32xf32>
    %c0_2 = arith.constant 0 : index
    %c0_3 = arith.constant 0 : index
    %c0_4 = arith.constant 0 : index
    %1 = vector.load %arg1[%c0_2, %c0_3, %c0_4] : memref<8x32x8xf32, #tpu.memory_space<vmem>>, vector<8x32x8xf32>
    "tpu.trace_start"() <{level = 10 : i32, message = "gse,ged->gsd"}> : () -> ()
    %cst = arith.constant dense<0.000000e+00> : vector<8x8x8xf32>
    %2 = tpu.matmul %0, %1, %cst {dimension_numbers = #tpu.dot_dimension_numbers<[2], [1], [1], [2], [0, 0, 0, 1, 1, 2], [0], [0]>} : vector<8x8x32xf32>, vector<8x32x8xf32>, vector<8x8x8xf32> -> vector<8x8x8xf32>
    "tpu.trace_stop"() : () -> ()
    %c0_5 = arith.constant 0 : index
    %c0_6 = arith.constant 0 : index
    %c0_7 = arith.constant 0 : index
    %3 = vector.load %arg3[%c0_5, %c0_6, %c0_7] : memref<8x1x8xf32, #tpu.memory_space<vmem>>, vector<8x1x8xf32>
    %4 = vector.broadcast %3 : vector<8x1x8xf32> to vector<8x8x8xf32>
    %5 = arith.addf %2, %4 : vector<8x8x8xf32>
    %c0_8 = arith.constant 0 : index
    %c0_9 = arith.constant 0 : index
    %c0_10 = arith.constant 0 : index
    %6 = vector.load %arg2[%c0_8, %c0_9, %c0_10] : memref<8x32x8xf32, #tpu.memory_space<vmem>>, vector<8x32x8xf32>
    "tpu.trace_start"() <{level = 10 : i32, message = "gse,ged->gsd"}> : () -> ()
    %cst_11 = arith.constant dense<0.000000e+00> : vector<8x8x8xf32>
    %7 = tpu.matmul %0, %6, %cst_11 {dimension_numbers = #tpu.dot_dimension_numbers<[2], [1], [1], [2], [0, 0, 0, 1, 1, 2], [0], [0]>} : vector<8x8x32xf32>, vector<8x32x8xf32>, vector<8x8x8xf32> -> vector<8x8x8xf32>
    "tpu.trace_stop"() : () -> ()
    %c0_12 = arith.constant 0 : index
    %c0_13 = arith.constant 0 : index
    %c0_14 = arith.constant 0 : index
    %8 = vector.load %arg4[%c0_12, %c0_13, %c0_14] : memref<8x1x8xf32, #tpu.memory_space<vmem>>, vector<8x1x8xf32>
    %9 = vector.broadcast %8 : vector<8x1x8xf32> to vector<8x8x8xf32>
    %10 = arith.addf %7, %9 : vector<8x8x8xf32>
    "tpu.trace_start"() <{level = 10 : i32, message = "gqd,gkd->gqk"}> : () -> ()
    %cst_15 = arith.constant dense<0.000000e+00> : vector<8x8x8xf32>
    %11 = tpu.matmul %5, %10, %cst_15 {dimension_numbers = #tpu.dot_dimension_numbers<[2], [2], [1], [1], [0, 0, 0, 1, 1, 1], [0], [0]>} : vector<8x8x8xf32>, vector<8x8x8xf32>, vector<8x8x8xf32> -> vector<8x8x8xf32>
    "tpu.trace_stop"() : () -> ()
    %cst_16 = arith.constant 0.353553385 : f32
    %12 = vector.broadcast %cst_16 : f32 to vector<8x8x8xf32>
    %13 = arith.mulf %11, %12 : vector<8x8x8xf32>
    %c0_17 = arith.constant 0 : index
    %c0_18 = arith.constant 0 : index
    %c0_19 = arith.constant 0 : index
    %14 = vector.load %arg5[%c0_17, %c0_18, %c0_19] : memref<8x1x8xf32, #tpu.memory_space<vmem>>, vector<8x1x8xf32>
    %15 = vector.broadcast %14 : vector<8x1x8xf32> to vector<8x8x8xf32>
    %16 = arith.addf %13, %15 : vector<8x8x8xf32>
    %cst_20 = arith.constant dense<0xFF800000> : vector<8x8xf32>
    %17 = vector.multi_reduction <maximumf>, %16, %cst_20 [2] : vector<8x8x8xf32> to vector<8x8xf32>
    %18 = vector.shape_cast %17 : vector<8x8xf32> to vector<8x8x1xf32>
    %19 = vector.broadcast %18 : vector<8x8x1xf32> to vector<8x8x8xf32>
    %20 = arith.subf %16, %19 : vector<8x8x8xf32>
    %21 = math.exp %20 : vector<8x8x8xf32>
    %cst_21 = arith.constant dense<0.000000e+00> : vector<8x8xf32>
    %22 = vector.multi_reduction <add>, %21, %cst_21 [2] : vector<8x8x8xf32> to vector<8x8xf32>
    %23 = vector.shape_cast %22 : vector<8x8xf32> to vector<8x8x1xf32>
    %24 = tpu.reciprocal %23 {approx = true} : vector<8x8x1xf32> -> vector<8x8x1xf32>
    %25 = arith.mulf %23, %24 : vector<8x8x1xf32>
    %cst_22 = arith.constant 2.000000e+00 : f32
    %26 = vector.broadcast %cst_22 : f32 to vector<8x8x1xf32>
    %27 = arith.subf %26, %25 : vector<8x8x1xf32>
    %28 = arith.mulf %24, %27 : vector<8x8x1xf32>
    %29 = vector.broadcast %28 : vector<8x8x1xf32> to vector<8x8x8xf32>
    %30 = arith.mulf %21, %29 : vector<8x8x8xf32>
    %31 = vector.shape_cast %30 : vector<8x8x8xf32> to vector<2x4x8x8xf32>
    %cst_23 = arith.constant dense<0.000000e+00> : vector<2x8x8xf32>
    %32 = vector.multi_reduction <add>, %31, %cst_23 [1] : vector<2x4x8x8xf32> to vector<2x8x8xf32>
    %cst_24 = arith.constant 4.000000e+00 : f32
    %33 = vector.broadcast %cst_24 : f32 to vector<2x8x8xf32>
    %34 = arith.divf %32, %33 : vector<2x8x8xf32>
    %c0_25 = arith.constant 0 : index
    %c0_26 = arith.constant 0 : index
    %c0_27 = arith.constant 0 : index
    %35 = vector.load %arg6[%c0_25, %c0_26, %c0_27] : memref<2x8x8xf32, #tpu.memory_space<vmem>>, vector<2x8x8xf32>
    tpu.vector_store %arg6[%c0_25, %c0_26, %c0_27], %34 {strides = array<i32>} : memref<2x8x8xf32, #tpu.memory_space<vmem>>, vector<2x8x8xf32>,
    return
  }
}

</mosaic_0001>

<llo_original>
// kernel: tpu_custom_call.1
$region0: #{tpu_custom_call.1}
  #allocation0 [shape = 'u32[]', space=smem, size = 0x4, offset = 0x4, fixed_abs, tag = 'smem constant byte address 0x4 - core index']
  #allocation1 [shape = 'u32[144,128]{1,0:T(1,128)}', space=vmem, size = 0x12000, scoped, tag = 'internal scratch']
  %s0 = inlined_call_operand.vmem [shape: f32[8,8,32], index: 0, kind: input, shape index: {}]
  %s1 = inlined_call_operand.vmem [shape: f32[8,32,8], index: 1, kind: input, shape index: {}]
  %s2 = inlined_call_operand.vmem [shape: f32[8,32,8], index: 2, kind: input, shape index: {}]
  %s3 = inlined_call_operand.vmem [shape: f32[8,1,8], index: 3, kind: input, shape index: {}]
  %s4 = inlined_call_operand.vmem [shape: f32[8,1,8], index: 4, kind: input, shape index: {}]
  %s5 = inlined_call_operand.vmem [shape: f32[8,1,8], index: 5, kind: input, shape index: {}]
  %s6 = inlined_call_operand.hbm [shape: f32[2,8,8], index: 6, kind: output, shape index: {}]
  %s7 = sld [smem:[#allocation0]]
  $region34: #{tpu_custom_call.1} parent=0
    _
  %s9 = ssub.s32 1, %s7
  %s10 = scalar_select 0, %s9, %s7
  $region1: #{tpu_custom_call.1} parent=0
    #allocation2 [shape = 'u8[8192]{0}', space=vmem, size = 0x2000, scoped, tag = 'output window, operand 0, single buffered']
    #allocation3 [shape = 's32[1]{0}', space=sflag, size = 0x4, scoped, tag = 'scoped memory for tpu_custom_call.1']
    %11 = vsyncpa [#allocation3], 0
    // Predicated region
    $region2: #{tpu_custom_call.1} parent=1 // pred_check
      _
    $region3: #{tpu_custom_call.1} parent=1 // pred_check_branch
      %13 = sbr.rel (0) target = $region5
    $region4: #{tpu_custom_call.1} parent=1 // pred_region
      _
    $region5: #{tpu_custom_call.1} parent=1 // pred_fallthru
      _
    // Predicated region
    $region6: #{tpu_custom_call.1} parent=1 // pred_check
      _
    $region7: #{tpu_custom_call.1} parent=1 // pred_check_branch
      %15 = sbr.rel (0) target = $region9
    $region8: #{tpu_custom_call.1} parent=1 // pred_region
      _
    $region9: #{tpu_custom_call.1} parent=1 // pred_fallthru
      _
    // Predicated region
    $region10: #{tpu_custom_call.1} parent=1 // pred_check
      _
    $region11: #{tpu_custom_call.1} parent=1 // pred_check_branch
      %17 = sbr.rel (0) target = $region13
    $region12: #{tpu_custom_call.1} parent=1 // pred_region
      _
    $region13: #{tpu_custom_call.1} parent=1 // pred_fallthru
      _
    // Predicated region
    $region14: #{tpu_custom_call.1} parent=1 // pred_check
      _
    $region15: #{tpu_custom_call.1} parent=1 // pred_check_branch
      %19 = sbr.rel (0) target = $region17
    $region16: #{tpu_custom_call.1} parent=1 // pred_region
      _
    $region17: #{tpu_custom_call.1} parent=1 // pred_fallthru
      _
    // Predicated region
    $region18: #{tpu_custom_call.1} parent=1 // pred_check
      _
    $region19: #{tpu_custom_call.1} parent=1 // pred_check_branch
      %21 = sbr.rel (0) target = $region21
    $region20: #{tpu_custom_call.1} parent=1 // pred_region
      _
    $region21: #{tpu_custom_call.1} parent=1 // pred_fallthru
      _
    // Predicated region
    $region22: #{tpu_custom_call.1} parent=1 // pred_check
      _
    $region23: #{tpu_custom_call.1} parent=1 // pred_check_branch
      %23 = sbr.rel (0) target = $region25
    $region24: #{tpu_custom_call.1} parent=1 // pred_region
      _
    $region25: #{tpu_custom_call.1} parent=1 // pred_fallthru
      _
    %v24 = vld [vmem:[%s0] sm:$0xff]
    %v25 = vld [vmem:[%s0 + $0x8] sm:$0xff]
    %v26 = vld [vmem:[%s0 + $0x10] sm:$0xff]
    %v27 = vld [vmem:[%s0 + $0x18] sm:$0xff]
    %v28 = vld [vmem:[%s0 + $0x20] sm:$0xff]
    %v29 = vld [vmem:[%s0 + $0x28] sm:$0xff]
    %v30 = vld [vmem:[%s0 + $0x30] sm:$0xff]
    %v31 = vld [vmem:[%s0 + $0x38] sm:$0xff]
    %v32 = vld [vmem:[%s1] sm:$0xff]
    %v33 = vld [vmem:[%s1 + $0x8] sm:$0xff]
    %v34 = vld [vmem:[%s1 + $0x10] sm:$0xff]
    %v35 = vld [vmem:[%s1 + $0x18] sm:$0xff]
    %v36 = vld [vmem:[%s1 + $0x20] sm:$0xff]
    %v37 = vld [vmem:[%s1 + $0x28] sm:$0xff]
    %v38 = vld [vmem:[%s1 + $0x30] sm:$0xff]
    %v39 = vld [vmem:[%s1 + $0x38] sm:$0xff]
    %v40 = vld [vmem:[%s1 + $0x40] sm:$0xff]
    %v41 = vld [vmem:[%s1 + $0x48] sm:$0xff]
    %v42 = vld [vmem:[%s1 + $0x50] sm:$0xff]
    %v43 = vld [vmem:[%s1 + $0x58] sm:$0xff]
    %v44 = vld [vmem:[%s1 + $0x60] sm:$0xff]
    %v45 = vld [vmem:[%s1 + $0x68] sm:$0xff]
    %v46 = vld [vmem:[%s1 + $0x70] sm:$0xff]
    %v47 = vld [vmem:[%s1 + $0x78] sm:$0xff]
    %v48 = vld [vmem:[%s1 + $0x80] sm:$0xff]
    %v49 = vld [vmem:[%s1 + $0x88] sm:$0xff]
    %v50 = vld [vmem:[%s1 + $0x90] sm:$0xff]
    %v51 = vld [vmem:[%s1 + $0x98] sm:$0xff]
    %v52 = vld [vmem:[%s1 + $0xa0] sm:$0xff]
    %v53 = vld [vmem:[%s1 + $0xa8] sm:$0xff]
    %v54 = vld [vmem:[%s1 + $0xb0] sm:$0xff]
    %v55 = vld [vmem:[%s1 + $0xb8] sm:$0xff]
    %v56 = vld [vmem:[%s1 + $0xc0] sm:$0xff]
    %v57 = vld [vmem:[%s1 + $0xc8] sm:$0xff]
    %v58 = vld [vmem:[%s1 + $0xd0] sm:$0xff]
    %v59 = vld [vmem:[%s1 + $0xd8] sm:$0xff]
    %v60 = vld [vmem:[%s1 + $0xe0] sm:$0xff]
    %v61 = vld [vmem:[%s1 + $0xe8] sm:$0xff]
    %v62 = vld [vmem:[%s1 + $0xf0] sm:$0xff]
    %v63 = vld [vmem:[%s1 + $0xf8] sm:$0xff]
    %v64 = vld [vmem:[%s3] sm:$0x1]
    %v65 = vld [vmem:[%s3 + $0x1] sm:$0x1]
    %v66 = vld [vmem:[%s3 + $0x2] sm:$0x1]
    %v67 = vld [vmem:[%s3 + $0x3] sm:$0x1]
    %v68 = vld [vmem:[%s3 + $0x4] sm:$0x1]
    %v69 = vld [vmem:[%s3 + $0x5] sm:$0x1]
    %v70 = vld [vmem:[%s3 + $0x6] sm:$0x1]
    %v71 = vld [vmem:[%s3 + $0x7] sm:$0x1]
    %v80 = vlaneseq
    %v81 = vshrl.u32 %v80, 7
    %v82 = vsub.s32 0, %v81
    %v83 = vrot.slane %v64, %v82
    %v84 = vlaneseq
    %v85 = vshrl.u32 %v84, 7
    %v86 = vsub.s32 0, %v85
    %v87 = vrot.slane %v65, %v86
    %v88 = vlaneseq
    %v89 = vshrl.u32 %v88, 7
    %v90 = vsub.s32 0, %v89
    %v91 = vrot.slane %v66, %v90
    %v92 = vlaneseq
    %v93 = vshrl.u32 %v92, 7
    %v94 = vsub.s32 0, %v93
    %v95 = vrot.slane %v67, %v94
    %v96 = vlaneseq
    %v97 = vshrl.u32 %v96, 7
    %v98 = vsub.s32 0, %v97
    %v99 = vrot.slane %v68, %v98
    %v100 = vlaneseq
    %v101 = vshrl.u32 %v100, 7
    %v102 = vsub.s32 0, %v101
    %v103 = vrot.slane %v69, %v102
    %v104 = vlaneseq
    %v105 = vshrl.u32 %v104, 7
    %v106 = vsub.s32 0, %v105
    %v107 = vrot.slane %v70, %v106
    %v108 = vlaneseq
    %v109 = vshrl.u32 %v108, 7
    %v110 = vsub.s32 0, %v109
    %v111 = vrot.slane %v71, %v110
    %vm120 = vcmask 261120
    %v122 = vsel %vm120, %v24, 0
    %124 = vmatprep.subr.mxu0 0.0
    %125 = vmatpush1.msra.mxu0 %v32
    %126 = vmatprep.subr.mxu0 0.0
    %127 = vmatpush1.msra.mxu0 %v33
    %128 = vmatprep.subr.mxu0 0.0
    %129 = vmatpush1.msra.mxu0 %v34
    %130 = vmatprep.subr.mxu0 0.0
    %131 = vmatpush1.msra.mxu0 %v35
    %132 = vmatprep.subr.mxu0 0.0
    %133 = vmatpush1.msra.mxu0 0.0
    %134 = vmatprep.subr.mxu0 0.0
    %135 = vmatpush1.msra.mxu0 0.0
    %136 = vmatprep.subr.mxu0 0.0
    %137 = vmatpush1.msra.mxu0 0.0
    %138 = vmatprep.subr.mxu0 0.0
    %139 = vmatpush1.msra.mxu0 0.0
    %140 = vmatprep.subr.mxu0 0.0
    %141 = vmatpush1.msra.mxu0 0.0
    %142 = vmatprep.subr.mxu0 0.0
    %143 = vmatpush1.msra.mxu0 0.0
    %144 = vmatprep.subr.mxu0 0.0
    %145 = vmatpush1.msra.mxu0 0.0
    %146 = vmatprep.subr.mxu0 0.0
    %147 = vmatpush1.msra.mxu0 0.0
    %148 = vmatprep.subr.mxu0 0.0
    %149 = vmatpush1.msra.mxu0 0.0
    %150 = vmatprep.subr.mxu0 0.0
    %151 = vmatpush1.msra.mxu0 0.0
    %152 = vmatprep.subr.mxu0 0.0
    %153 = vmatpush1.msra.mxu0 0.0
    %154 = vmatprep.subr.mxu0 0.0
    %155 = vmatpush1.msra.mxu0 0.0
    %156 = vmatprep.subr.mxu0 0.0
    %157 = vmatpush1.msra.mxu0 0.0
    %158 = vmatprep.subr.mxu0 0.0
    %159 = vmatpush1.msra.mxu0 0.0
    %160 = vmatprep.subr.mxu0 0.0
    %161 = vmatpush1.msra.mxu0 0.0
    %162 = vmatprep.subr.mxu0 0.0
    %163 = vmatpush1.msra.mxu0 0.0
    %164 = vmatprep.subr.mxu0 0.0
    %165 = vmatpush1.msra.mxu0 0.0
    %166 = vmatprep.subr.mxu0 0.0
    %167 = vmatpush1.msra.mxu0 0.0
    %168 = vmatprep.subr.mxu0 0.0
    %169 = vmatpush1.msra.mxu0 0.0
    %170 = vmatprep.subr.mxu0 0.0
    %171 = vmatpush1.msra.mxu0 0.0
    %172 = vmatprep.subr.mxu0 0.0
    %173 = vmatpush1.msra.mxu0 0.0
    %174 = vmatprep.subr.mxu0 0.0
    %175 = vmatpush1.msra.mxu0 0.0
    %176 = vmatprep.subr.mxu0 0.0
    %177 = vmatpush1.msra.mxu0 0.0
    %178 = vmatprep.subr.mxu0 0.0
    %179 = vmatpush1.msra.mxu0 0.0
    %180 = vmatprep.subr.mxu0 0.0
    %181 = vmatpush1.msra.mxu0 0.0
    %182 = vmatprep.subr.mxu0 0.0
    %183 = vmatpush1.msra.mxu0 0.0
    %184 = vmatprep.subr.mxu0 0.0
    %185 = vmatpush1.msra.mxu0 0.0
    %186 = vmatprep.subr.mxu0 0.0
    %187 = vmatpush1.msra.mxu0 0.0
    %188 = vmatprep.mubr.f32.mxu0 0.0
    %189 = vmatmul.mubr.f32.gmra.mrb[0].mxu0 %v122
    %v190 = vpop.f32.mrb[0].mxu0
    %v191 = vadd.f32 %v83, %v190
    %v192 = vpop.f32.mrb[0].mxu0
    %193 = vdwg.mxu0
    %v195 = vsel %vm120, %v25, 0
    %197 = vmatprep.subr.mxu0 0.0
    %198 = vmatpush1.msra.mxu0 %v36
    %199 = vmatprep.subr.mxu0 0.0
    %200 = vmatpush1.msra.mxu0 %v37
    %201 = vmatprep.subr.mxu0 0.0
    %202 = vmatpush1.msra.mxu0 %v38
    %203 = vmatprep.subr.mxu0 0.0
    %204 = vmatpush1.msra.mxu0 %v39
    %205 = vmatprep.subr.mxu0 0.0
    %206 = vmatpush1.msra.mxu0 0.0
    %207 = vmatprep.subr.mxu0 0.0
    %208 = vmatpush1.msra.mxu0 0.0
    %209 = vmatprep.subr.mxu0 0.0
    %210 = vmatpush1.msra.mxu0 0.0
    %211 = vmatprep.subr.mxu0 0.0
    %212 = vmatpush1.msra.mxu0 0.0
    %213 = vmatprep.subr.mxu0 0.0
    %214 = vmatpush1.msra.mxu0 0.0
    %215 = vmatprep.subr.mxu0 0.0
    %216 = vmatpush1.msra.mxu0 0.0
    %217 = vmatprep.subr.mxu0 0.0
    %218 = vmatpush1.msra.mxu0 0.0
    %219 = vmatprep.subr.mxu0 0.0
    %220 = vmatpush1.msra.mxu0 0.0
    %221 = vmatprep.subr.mxu0 0.0
    %222 = vmatpush1.msra.mxu0 0.0
    %223 = vmatprep.subr.mxu0 0.0
    %224 = vmatpush1.msra.mxu0 0.0
    %225 = vmatprep.subr.mxu0 0.0
    %226 = vmatpush1.msra.mxu0 0.0
    %227 = vmatprep.subr.mxu0 0.0
    %228 = vmatpush1.msra.mxu0 0.0
    %229 = vmatprep.subr.mxu0 0.0
    %230 = vmatpush1.msra.mxu0 0.0
    %231 = vmatprep.subr.mxu0 0.0
    %232 = vmatpush1.msra.mxu0 0.0
    %233 = vmatprep.subr.mxu0 0.0
    %234 = vmatpush1.msra.mxu0 0.0
    %235 = vmatprep.subr.mxu0 0.0
    %236 = vmatpush1.msra.mxu0 0.0
    %237 = vmatprep.subr.mxu0 0.0
    %238 = vmatpush1.msra.mxu0 0.0
    %239 = vmatprep.subr.mxu0 0.0
    %240 = vmatpush1.msra.mxu0 0.0
    %241 = vmatprep.subr.mxu0 0.0
    %242 = vmatpush1.msra.mxu0 0.0
    %243 = vmatprep.subr.mxu0 0.0
    %244 = vmatpush1.msra.mxu0 0.0
    %245 = vmatprep.subr.mxu0 0.0
    %246 = vmatpush1.msra.mxu0 0.0
    %247 = vmatprep.subr.mxu0 0.0
    %248 = vmatpush1.msra.mxu0 0.0
    %249 = vmatprep.subr.mxu0 0.0
    %250 = vmatpush1.msra.mxu0 0.0
    %251 = vmatprep.subr.mxu0 0.0
    %252 = vmatpush1.msra.mxu0 0.0
    %253 = vmatprep.subr.mxu0 0.0
    %254 = vmatpush1.msra.mxu0 0.0
    %255 = vmatprep.subr.mxu0 0.0
    %256 = vmatpush1.msra.mxu0 0.0
    %257 = vmatprep.subr.mxu0 0.0
    %258 = vmatpush1.msra.mxu0 0.0
    %259 = vmatprep.subr.mxu0 0.0
    %260 = vmatpush1.msra.mxu0 0.0
    %261 = vmatprep.mubr.f32.mxu0 0.0
    %262 = vmatmul.mubr.f32.gmra.mrb[0].mxu0 %v195
    %v263 = vpop.f32.mrb[0].mxu0
    %v264 = vadd.f32 %v87, %v263
    %v265 = vpop.f32.mrb[0].mxu0
    %266 = vdwg.mxu0
    %v268 = vsel %vm120, %v26, 0
    %270 = vmatprep.subr.mxu0 0.0
    %271 = vmatpush1.msra.mxu0 %v40
    %272 = vmatprep.subr.mxu0 0.0
    %273 = vmatpush1.msra.mxu0 %v41
    %274 = vmatprep.subr.mxu0 0.0
    %275 = vmatpush1.msra.mxu0 %v42
    %276 = vmatprep.subr.mxu0 0.0
    %277 = vmatpush1.msra.mxu0 %v43
    %278 = vmatprep.subr.mxu0 0.0
    %279 = vmatpush1.msra.mxu0 0.0
    %280 = vmatprep.subr.mxu0 0.0
    %281 = vmatpush1.msra.mxu0 0.0
    %282 = vmatprep.subr.mxu0 0.0
    %283 = vmatpush1.msra.mxu0 0.0
    %284 = vmatprep.subr.mxu0 0.0
    %285 = vmatpush1.msra.mxu0 0.0
    %286 = vmatprep.subr.mxu0 0.0
    %287 = vmatpush1.msra.mxu0 0.0
    %288 = vmatprep.subr.mxu0 0.0
    %289 = vmatpush1.msra.mxu0 0.0
    %290 = vmatprep.subr.mxu0 0.0
    %291 = vmatpush1.msra.mxu0 0.0
    %292 = vmatprep.subr.mxu0 0.0
    %293 = vmatpush1.msra.mxu0 0.0
    %294 = vmatprep.subr.mxu0 0.0
    %295 = vmatpush1.msra.mxu0 0.0
    %296 = vmatprep.subr.mxu0 0.0
    %297 = vmatpush1.msra.mxu0 0.0
    %298 = vmatprep.subr.mxu0 0.0
    %299 = vmatpush1.msra.mxu0 0.0
    %300 = vmatprep.subr.mxu0 0.0
    %301 = vmatpush1.msra.mxu0 0.0
    %302 = vmatprep.subr.mxu0 0.0
    %303 = vmatpush1.msra.mxu0 0.0
    %304 = vmatprep.subr.mxu0 0.0
    %305 = vmatpush1.msra.mxu0 0.0
    %306 = vmatprep.subr.mxu0 0.0
    %307 = vmatpush1.msra.mxu0 0.0
    %308 = vmatprep.subr.mxu0 0.0
    %309 = vmatpush1.msra.mxu0 0.0
    %310 = vmatprep.subr.mxu0 0.0
    %311 = vmatpush1.msra.mxu0 0.0
    %312 = vmatprep.subr.mxu0 0.0
    %313 = vmatpush1.msra.mxu0 0.0
    %314 = vmatprep.subr.mxu0 0.0
    %315 = vmatpush1.msra.mxu0 0.0
    %316 = vmatprep.subr.mxu0 0.0
    %317 = vmatpush1.msra.mxu0 0.0
    %318 = vmatprep.subr.mxu0 0.0
    %319 = vmatpush1.msra.mxu0 0.0
    %320 = vmatprep.subr.mxu0 0.0
    %321 = vmatpush1.msra.mxu0 0.0
    %322 = vmatprep.subr.mxu0 0.0
    %323 = vmatpush1.msra.mxu0 0.0
    %324 = vmatprep.subr.mxu0 0.0
    %325 = vmatpush1.msra.mxu0 0.0
    %326 = vmatprep.subr.mxu0 0.0
    %327 = vmatpush1.msra.mxu0 0.0
    %328 = vmatprep.subr.mxu0 0.0
    %329 = vmatpush1.msra.mxu0 0.0
    %330 = vmatprep.subr.mxu0 0.0
    %331 = vmatpush1.msra.mxu0 0.0
    %332 = vmatprep.subr.mxu0 0.0
    %333 = vmatpush1.msra.mxu0 0.0
    %334 = vmatprep.mubr.f32.mxu0 0.0
    %335 = vmatmul.mubr.f32.gmra.mrb[0].mxu0 %v268
    %v336 = vpop.f32.mrb[0].mxu0
    %v337 = vadd.f32 %v91, %v336
    %v338 = vpop.f32.mrb[0].mxu0
    %339 = vdwg.mxu0
    %v341 = vsel %vm120, %v27, 0
    %343 = vmatprep.subr.mxu0 0.0
    %344 = vmatpush1.msra.mxu0 %v44
    %345 = vmatprep.subr.mxu0 0.0
    %346 = vmatpush1.msra.mxu0 %v45
    %347 = vmatprep.subr.mxu0 0.0
    %348 = vmatpush1.msra.mxu0 %v46
    %349 = vmatprep.subr.mxu0 0.0
    %350 = vmatpush1.msra.mxu0 %v47
    %351 = vmatprep.subr.mxu0 0.0
    %352 = vmatpush1.msra.mxu0 0.0
    %353 = vmatprep.subr.mxu0 0.0
    %354 = vmatpush1.msra.mxu0 0.0
    %355 = vmatprep.subr.mxu0 0.0
    %356 = vmatpush1.msra.mxu0 0.0
    %357 = vmatprep.subr.mxu0 0.0
    %358 = vmatpush1.msra.mxu0 0.0
    %359 = vmatprep.subr.mxu0 0.0
    %360 = vmatpush1.msra.mxu0 0.0
    %361 = vmatprep.subr.mxu0 0.0
    %362 = vmatpush1.msra.mxu0 0.0
    %363 = vmatprep.subr.mxu0 0.0
    %364 = vmatpush1.msra.mxu0 0.0
    %365 = vmatprep.subr.mxu0 0.0
    %366 = vmatpush1.msra.mxu0 0.0
    %367 = vmatprep.subr.mxu0 0.0
    %368 = vmatpush1.msra.mxu0 0.0
    %369 = vmatprep.subr.mxu0 0.0
    %370 = vmatpush1.msra.mxu0 0.0
    %371 = vmatprep.subr.mxu0 0.0
    %372 = vmatpush1.msra.mxu0 0.0
    %373 = vmatprep.subr.mxu0 0.0
    %374 = vmatpush1.msra.mxu0 0.0
    %375 = vmatprep.subr.mxu0 0.0
    %376 = vmatpush1.msra.mxu0 0.0
    %377 = vmatprep.subr.mxu0 0.0
    %378 = vmatpush1.msra.mxu0 0.0
    %379 = vmatprep.subr.mxu0 0.0
    %380 = vmatpush1.msra.mxu0 0.0
    %381 = vmatprep.subr.mxu0 0.0
    %382 = vmatpush1.msra.mxu0 0.0
    %383 = vmatprep.subr.mxu0 0.0
    %384 = vmatpush1.msra.mxu0 0.0
    %385 = vmatprep.subr.mxu0 0.0
    %386 = vmatpush1.msra.mxu0 0.0
    %387 = vmatprep.subr.mxu0 0.0
    %388 = vmatpush1.msra.mxu0 0.0
    %389 = vmatprep.subr.mxu0 0.0
    %390 = vmatpush1.msra.mxu0 0.0
    %391 = vmatprep.subr.mxu0 0.0
    %392 = vmatpush1.msra.mxu0 0.0
    %393 = vmatprep.subr.mxu0 0.0
    %394 = vmatpush1.msra.mxu0 0.0
    %395 = vmatprep.subr.mxu0 0.0
    %396 = vmatpush1.msra.mxu0 0.0
    %397 = vmatprep.subr.mxu0 0.0
    %398 = vmatpush1.msra.mxu0 0.0
    %399 = vmatprep.subr.mxu0 0.0
    %400 = vmatpush1.msra.mxu0 0.0
    %401 = vmatprep.subr.mxu0 0.0
    %402 = vmatpush1.msra.mxu0 0.0
    %403 = vmatprep.subr.mxu0 0.0
    %404 = vmatpush1.msra.mxu0 0.0
    %405 = vmatprep.subr.mxu0 0.0
    %406 = vmatpush1.msra.mxu0 0.0
    %407 = vmatprep.mubr.f32.mxu0 0.0
    %408 = vmatmul.mubr.f32.gmra.mrb[0].mxu0 %v341
    %v409 = vpop.f32.mrb[0].mxu0
    %v410 = vadd.f32 %v95, %v409
    %v411 = vpop.f32.mrb[0].mxu0
    %412 = vdwg.mxu0
    %v414 = vsel %vm120, %v28, 0
    %416 = vmatprep.subr.mxu0 0.0
    %417 = vmatpush1.msra.mxu0 %v48
    %418 = vmatprep.subr.mxu0 0.0
    %419 = vmatpush1.msra.mxu0 %v49
    %420 = vmatprep.subr.mxu0 0.0
    %421 = vmatpush1.msra.mxu0 %v50
    %422 = vmatprep.subr.mxu0 0.0
    %423 = vmatpush1.msra.mxu0 %v51
    %424 = vmatprep.subr.mxu0 0.0
    %425 = vmatpush1.msra.mxu0 0.0
    %426 = vmatprep.subr.mxu0 0.0
    %427 = vmatpush1.msra.mxu0 0.0
    %428 = vmatprep.subr.mxu0 0.0
    %429 = vmatpush1.msra.mxu0 0.0
    %430 = vmatprep.subr.mxu0 0.0
    %431 = vmatpush1.msra.mxu0 0.0
    %432 = vmatprep.subr.mxu0 0.0
    %433 = vmatpush1.msra.mxu0 0.0
    %434 = vmatprep.subr.mxu0 0.0
    %435 = vmatpush1.msra.mxu0 0.0
    %436 = vmatprep.subr.mxu0 0.0
    %437 = vmatpush1.msra.mxu0 0.0
    %438 = vmatprep.subr.mxu0 0.0
    %439 = vmatpush1.msra.mxu0 0.0
    %440 = vmatprep.subr.mxu0 0.0
    %441 = vmatpush1.msra.mxu0 0.0
    %442 = vmatprep.subr.mxu0 0.0
    %443 = vmatpush1.msra.mxu0 0.0
    %444 = vmatprep.subr.mxu0 0.0
    %445 = vmatpush1.msra.mxu0 0.0
    %446 = vmatprep.subr.mxu0 0.0
    %447 = vmatpush1.msra.mxu0 0.0
    %448 = vmatprep.subr.mxu0 0.0
    %449 = vmatpush1.msra.mxu0 0.0
    %450 = vmatprep.subr.mxu0 0.0
    %451 = vmatpush1.msra.mxu0 0.0
    %452 = vmatprep.subr.mxu0 0.0
    %453 = vmatpush1.msra.mxu0 0.0
    %454 = vmatprep.subr.mxu0 0.0
    %455 = vmatpush1.msra.mxu0 0.0
    %456 = vmatprep.subr.mxu0 0.0
    %457 = vmatpush1.msra.mxu0 0.0
    %458 = vmatprep.subr.mxu0 0.0
    %459 = vmatpush1.msra.mxu0 0.0
    %460 = vmatprep.subr.mxu0 0.0
    %461 = vmatpush1.msra.mxu0 0.0
    %462 = vmatprep.subr.mxu0 0.0
    %463 = vmatpush1.msra.mxu0 0.0
    %464 = vmatprep.subr.mxu0 0.0
    %465 = vmatpush1.msra.mxu0 0.0
    %466 = vmatprep.subr.mxu0 0.0
    %467 = vmatpush1.msra.mxu0 0.0
    %468 = vmatprep.subr.mxu0 0.0
    %469 = vmatpush1.msra.mxu0 0.0
    %470 = vmatprep.subr.mxu0 0.0
    %471 = vmatpush1.msra.mxu0 0.0
    %472 = vmatprep.subr.mxu0 0.0
    %473 = vmatpush1.msra.mxu0 0.0
    %474 = vmatprep.subr.mxu0 0.0
    %475 = vmatpush1.msra.mxu0 0.0
    %476 = vmatprep.subr.mxu0 0.0
    %477 = vmatpush1.msra.mxu0 0.0
    %478 = vmatprep.subr.mxu0 0.0
    %479 = vmatpush1.msra.mxu0 0.0
    %480 = vmatprep.mubr.f32.mxu0 0.0
    %481 = vmatmul.mubr.f32.gmra.mrb[0].mxu0 %v414
    %v482 = vpop.f32.mrb[0].mxu0
    %v483 = vadd.f32 %v99, %v482
    %v484 = vpop.f32.mrb[0].mxu0
    %485 = vdwg.mxu0
    %v487 = vsel %vm120, %v29, 0
    %489 = vmatprep.subr.mxu0 0.0
    %490 = vmatpush1.msra.mxu0 %v52
    %491 = vmatprep.subr.mxu0 0.0
    %492 = vmatpush1.msra.mxu0 %v53
    %493 = vmatprep.subr.mxu0 0.0
    %494 = vmatpush1.msra.mxu0 %v54
    %495 = vmatprep.subr.mxu0 0.0
    %496 = vmatpush1.msra.mxu0 %v55
    %497 = vmatprep.subr.mxu0 0.0
    %498 = vmatpush1.msra.mxu0 0.0
    %499 = vmatprep.subr.mxu0 0.0
    %500 = vmatpush1.msra.mxu0 0.0
    %501 = vmatprep.subr.mxu0 0.0
    %502 = vmatpush1.msra.mxu0 0.0
    %503 = vmatprep.subr.mxu0 0.0
    %504 = vmatpush1.msra.mxu0 0.0
    %505 = vmatprep.subr.mxu0 0.0
    %506 = vmatpush1.msra.mxu0 0.0
    %507 = vmatprep.subr.mxu0 0.0
    %508 = vmatpush1.msra.mxu0 0.0
    %509 = vmatprep.subr.mxu0 0.0
    %510 = vmatpush1.msra.mxu0 0.0
    %511 = vmatprep.subr.mxu0 0.0
    %512 = vmatpush1.msra.mxu0 0.0
    %513 = vmatprep.subr.mxu0 0.0
    %514 = vmatpush1.msra.mxu0 0.0
    %515 = vmatprep.subr.mxu0 0.0
    %516 = vmatpush1.msra.mxu0 0.0
    %517 = vmatprep.subr.mxu0 0.0
    %518 = vmatpush1.msra.mxu0 0.0
    %519 = vmatprep.subr.mxu0 0.0
    %520 = vmatpush1.msra.mxu0 0.0
    %521 = vmatprep.subr.mxu0 0.0
    %522 = vmatpush1.msra.mxu0 0.0
    %523 = vmatprep.subr.mxu0 0.0
    %524 = vmatpush1.msra.mxu0 0.0
    %525 = vmatprep.subr.mxu0 0.0
    %526 = vmatpush1.msra.mxu0 0.0
    %527 = vmatprep.subr.mxu0 0.0
    %528 = vmatpush1.msra.mxu0 0.0
    %529 = vmatprep.subr.mxu0 0.0
    %530 = vmatpush1.msra.mxu0 0.0
    %531 = vmatprep.subr.mxu0 0.0
    %532 = vmatpush1.msra.mxu0 0.0
    %533 = vmatprep.subr.mxu0 0.0
    %534 = vmatpush1.msra.mxu0 0.0
    %535 = vmatprep.subr.mxu0 0.0
    %536 = vmatpush1.msra.mxu0 0.0
    %537 = vmatprep.subr.mxu0 0.0
    %538 = vmatpush1.msra.mxu0 0.0
    %539 = vmatprep.subr.mxu0 0.0
    %540 = vmatpush1.msra.mxu0 0.0
    %541 = vmatprep.subr.mxu0 0.0
    %542 = vmatpush1.msra.mxu0 0.0
    %543 = vmatprep.subr.mxu0 0.0
    %544 = vmatpush1.msra.mxu0 0.0
    %545 = vmatprep.subr.mxu0 0.0
    %546 = vmatpush1.msra.mxu0 0.0
    %547 = vmatprep.subr.mxu0 0.0
    %548 = vmatpush1.msra.mxu0 0.0
    %549 = vmatprep.subr.mxu0 0.0
    %550 = vmatpush1.msra.mxu0 0.0
    %551 = vmatprep.subr.mxu0 0.0
    %552 = vmatpush1.msra.mxu0 0.0
    %553 = vmatprep.mubr.f32.mxu0 0.0
    %554 = vmatmul.mubr.f32.gmra.mrb[0].mxu0 %v487
    %v555 = vpop.f32.mrb[0].mxu0
    %v556 = vadd.f32 %v103, %v555
    %v557 = vpop.f32.mrb[0].mxu0
    %558 = vdwg.mxu0
    %v560 = vsel %vm120, %v30, 0
    %562 = vmatprep.subr.mxu0 0.0
    %563 = vmatpush1.msra.mxu0 %v56
    %564 = vmatprep.subr.mxu0 0.0
    %565 = vmatpush1.msra.mxu0 %v57
    %566 = vmatprep.subr.mxu0 0.0
    %567 = vmatpush1.msra.mxu0 %v58
    %568 = vmatprep.subr.mxu0 0.0
    %569 = vmatpush1.msra.mxu0 %v59
    %570 = vmatprep.subr.mxu0 0.0
    %571 = vmatpush1.msra.mxu0 0.0
    %572 = vmatprep.subr.mxu0 0.0
    %573 = vmatpush1.msra.mxu0 0.0
    %574 = vmatprep.subr.mxu0 0.0
    %575 = vmatpush1.msra.mxu0 0.0
    %576 = vmatprep.subr.mxu0 0.0
    %577 = vmatpush1.msra.mxu0 0.0
    %578 = vmatprep.subr.mxu0 0.0
    %579 = vmatpush1.msra.mxu0 0.0
    %580 = vmatprep.subr.mxu0 0.0
    %581 = vmatpush1.msra.mxu0 0.0
    %582 = vmatprep.subr.mxu0 0.0
    %583 = vmatpush1.msra.mxu0 0.0
    %584 = vmatprep.subr.mxu0 0.0
    %585 = vmatpush1.msra.mxu0 0.0
    %586 = vmatprep.subr.mxu0 0.0
    %587 = vmatpush1.msra.mxu0 0.0
    %588 = vmatprep.subr.mxu0 0.0
    %589 = vmatpush1.msra.mxu0 0.0
    %590 = vmatprep.subr.mxu0 0.0
    %591 = vmatpush1.msra.mxu0 0.0
    %592 = vmatprep.subr.mxu0 0.0
    %593 = vmatpush1.msra.mxu0 0.0
    %594 = vmatprep.subr.mxu0 0.0
    %595 = vmatpush1.msra.mxu0 0.0
    %596 = vmatprep.subr.mxu0 0.0
    %597 = vmatpush1.msra.mxu0 0.0
    %598 = vmatprep.subr.mxu0 0.0
    %599 = vmatpush1.msra.mxu0 0.0
    %600 = vmatprep.subr.mxu0 0.0
    %601 = vmatpush1.msra.mxu0 0.0
    %602 = vmatprep.subr.mxu0 0.0
    %603 = vmatpush1.msra.mxu0 0.0
    %604 = vmatprep.subr.mxu0 0.0
    %605 = vmatpush1.msra.mxu0 0.0
    %606 = vmatprep.subr.mxu0 0.0
    %607 = vmatpush1.msra.mxu0 0.0
    %608 = vmatprep.subr.mxu0 0.0
    %609 = vmatpush1.msra.mxu0 0.0
    %610 = vmatprep.subr.mxu0 0.0
    %611 = vmatpush1.msra.mxu0 0.0
    %612 = vmatprep.subr.mxu0 0.0
    %613 = vmatpush1.msra.mxu0 0.0
    %614 = vmatprep.subr.mxu0 0.0
    %615 = vmatpush1.msra.mxu0 0.0
    %616 = vmatprep.subr.mxu0 0.0
    %617 = vmatpush1.msra.mxu0 0.0
    %618 = vmatprep.subr.mxu0 0.0
    %619 = vmatpush1.msra.mxu0 0.0
    %620 = vmatprep.subr.mxu0 0.0
    %621 = vmatpush1.msra.mxu0 0.0
    %622 = vmatprep.subr.mxu0 0.0
    %623 = vmatpush1.msra.mxu0 0.0
    %624 = vmatprep.subr.mxu0 0.0
    %625 = vmatpush1.msra.mxu0 0.0
    %626 = vmatprep.mubr.f32.mxu0 0.0
    %627 = vmatmul.mubr.f32.gmra.mrb[0].mxu0 %v560
    %v628 = vpop.f32.mrb[0].mxu0
    %v629 = vadd.f32 %v107, %v628
    %v630 = vpop.f32.mrb[0].mxu0
    %631 = vdwg.mxu0
    %v633 = vsel %vm120, %v31, 0
    %635 = vmatprep.subr.mxu0 0.0
    %636 = vmatpush1.msra.mxu0 %v60
    %637 = vmatprep.subr.mxu0 0.0
    %638 = vmatpush1.msra.mxu0 %v61
    %639 = vmatprep.subr.mxu0 0.0
    %640 = vmatpush1.msra.mxu0 %v62
    %641 = vmatprep.subr.mxu0 0.0
    %642 = vmatpush1.msra.mxu0 %v63
    %643 = vmatprep.subr.mxu0 0.0
    %644 = vmatpush1.msra.mxu0 0.0
    %645 = vmatprep.subr.mxu0 0.0
    %646 = vmatpush1.msra.mxu0 0.0
    %647 = vmatprep.subr.mxu0 0.0
    %648 = vmatpush1.msra.mxu0 0.0
    %649 = vmatprep.subr.mxu0 0.0
    %650 = vmatpush1.msra.mxu0 0.0
    %651 = vmatprep.subr.mxu0 0.0
    %652 = vmatpush1.msra.mxu0 0.0
    %653 = vmatprep.subr.mxu0 0.0
    %654 = vmatpush1.msra.mxu0 0.0
    %655 = vmatprep.subr.mxu0 0.0
    %656 = vmatpush1.msra.mxu0 0.0
    %657 = vmatprep.subr.mxu0 0.0
    %658 = vmatpush1.msra.mxu0 0.0
    %659 = vmatprep.subr.mxu0 0.0
    %660 = vmatpush1.msra.mxu0 0.0
    %661 = vmatprep.subr.mxu0 0.0
    %662 = vmatpush1.msra.mxu0 0.0
    %663 = vmatprep.subr.mxu0 0.0
    %664 = vmatpush1.msra.mxu0 0.0
    %665 = vmatprep.subr.mxu0 0.0
    %666 = vmatpush1.msra.mxu0 0.0
    %667 = vmatprep.subr.mxu0 0.0
    %668 = vmatpush1.msra.mxu0 0.0
    %669 = vmatprep.subr.mxu0 0.0
    %670 = vmatpush1.msra.mxu0 0.0
    %671 = vmatprep.subr.mxu0 0.0
    %672 = vmatpush1.msra.mxu0 0.0
    %673 = vmatprep.subr.mxu0 0.0
    %674 = vmatpush1.msra.mxu0 0.0
    %675 = vmatprep.subr.mxu0 0.0
    %676 = vmatpush1.msra.mxu0 0.0
    %677 = vmatprep.subr.mxu0 0.0
    %678 = vmatpush1.msra.mxu0 0.0
    %679 = vmatprep.subr.mxu0 0.0
    %680 = vmatpush1.msra.mxu0 0.0
    %681 = vmatprep.subr.mxu0 0.0
    %682 = vmatpush1.msra.mxu0 0.0
    %683 = vmatprep.subr.mxu0 0.0
    %684 = vmatpush1.msra.mxu0 0.0
    %685 = vmatprep.subr.mxu0 0.0
    %686 = vmatpush1.msra.mxu0 0.0
    %687 = vmatprep.subr.mxu0 0.0
    %688 = vmatpush1.msra.mxu0 0.0
    %689 = vmatprep.subr.mxu0 0.0
    %690 = vmatpush1.msra.mxu0 0.0
    %691 = vmatprep.subr.mxu0 0.0
    %692 = vmatpush1.msra.mxu0 0.0
    %693 = vmatprep.subr.mxu0 0.0
    %694 = vmatpush1.msra.mxu0 0.0
    %695 = vmatprep.subr.mxu0 0.0
    %696 = vmatpush1.msra.mxu0 0.0
    %697 = vmatprep.subr.mxu0 0.0
    %698 = vmatpush1.msra.mxu0 0.0
    %699 = vmatprep.mubr.f32.mxu0 0.0
    %700 = vmatmul.mubr.f32.gmra.mrb[0].mxu0 %v633
    %v701 = vpop.f32.mrb[0].mxu0
    %v702 = vadd.f32 %v111, %v701
    %v703 = vpop.f32.mrb[0].mxu0
    %704 = vdwg.mxu0
    %v705 = vld [vmem:[%s2] sm:$0xff]
    %v706 = vld [vmem:[%s2 + $0x8] sm:$0xff]
    %v707 = vld [vmem:[%s2 + $0x10] sm:$0xff]
    %v708 = vld [vmem:[%s2 + $0x18] sm:$0xff]
    %v709 = vld [vmem:[%s2 + $0x20] sm:$0xff]
    %v710 = vld [vmem:[%s2 + $0x28] sm:$0xff]
    %v711 = vld [vmem:[%s2 + $0x30] sm:$0xff]
    %v712 = vld [vmem:[%s2 + $0x38] sm:$0xff]
    %v713 = vld [vmem:[%s2 + $0x40] sm:$0xff]
    %v714 = vld [vmem:[%s2 + $0x48] sm:$0xff]
    %v715 = vld [vmem:[%s2 + $0x50] sm:$0xff]
    %v716 = vld [vmem:[%s2 + $0x58] sm:$0xff]
    %v717 = vld [vmem:[%s2 + $0x60] sm:$0xff]
    %v718 = vld [vmem:[%s2 + $0x68] sm:$0xff]
    %v719 = vld [vmem:[%s2 + $0x70] sm:$0xff]
    %v720 = vld [vmem:[%s2 + $0x78] sm:$0xff]
    %v721 = vld [vmem:[%s2 + $0x80] sm:$0xff]
    %v722 = vld [vmem:[%s2 + $0x88] sm:$0xff]
    %v723 = vld [vmem:[%s2 + $0x90] sm:$0xff]
    %v724 = vld [vmem:[%s2 + $0x98] sm:$0xff]
    %v725 = vld [vmem:[%s2 + $0xa0] sm:$0xff]
    %v726 = vld [vmem:[%s2 + $0xa8] sm:$0xff]
    %v727 = vld [vmem:[%s2 + $0xb0] sm:$0xff]
    %v728 = vld [vmem:[%s2 + $0xb8] sm:$0xff]
    %v729 = vld [vmem:[%s2 + $0xc0] sm:$0xff]
    %v730 = vld [vmem:[%s2 + $0xc8] sm:$0xff]
    %v731 = vld [vmem:[%s2 + $0xd0] sm:$0xff]
    %v732 = vld [vmem:[%s2 + $0xd8] sm:$0xff]
    %v733 = vld [vmem:[%s2 + $0xe0] sm:$0xff]
    %v734 = vld [vmem:[%s2 + $0xe8] sm:$0xff]
    %v735 = vld [vmem:[%s2 + $0xf0] sm:$0xff]
    %v736 = vld [vmem:[%s2 + $0xf8] sm:$0xff]
    %v737 = vld [vmem:[%s4] sm:$0x1]
    %v738 = vld [vmem:[%s4 + $0x1] sm:$0x1]
    %v739 = vld [vmem:[%s4 + $0x2] sm:$0x1]
    %v740 = vld [vmem:[%s4 + $0x3] sm:$0x1]
    %v741 = vld [vmem:[%s4 + $0x4] sm:$0x1]
    %v742 = vld [vmem:[%s4 + $0x5] sm:$0x1]
    %v743 = vld [vmem:[%s4 + $0x6] sm:$0x1]
    %v744 = vld [vmem:[%s4 + $0x7] sm:$0x1]
    %v753 = vlaneseq
    %v754 = vshrl.u32 %v753, 7
    %v755 = vsub.s32 0, %v754
    %v756 = vrot.slane %v737, %v755
    %v757 = vlaneseq
    %v758 = vshrl.u32 %v757, 7
    %v759 = vsub.s32 0, %v758
    %v760 = vrot.slane %v738, %v759
    %v761 = vlaneseq
    %v762 = vshrl.u32 %v761, 7
    %v763 = vsub.s32 0, %v762
    %v764 = vrot.slane %v739, %v763
    %v765 = vlaneseq
    %v766 = vshrl.u32 %v765, 7
    %v767 = vsub.s32 0, %v766
    %v768 = vrot.slane %v740, %v767
    %v769 = vlaneseq
    %v770 = vshrl.u32 %v769, 7
    %v771 = vsub.s32 0, %v770
    %v772 = vrot.slane %v741, %v771
    %v773 = vlaneseq
    %v774 = vshrl.u32 %v773, 7
    %v775 = vsub.s32 0, %v774
    %v776 = vrot.slane %v742, %v775
    %v777 = vlaneseq
    %v778 = vshrl.u32 %v777, 7
    %v779 = vsub.s32 0, %v778
    %v780 = vrot.slane %v743, %v779
    %v781 = vlaneseq
    %v782 = vshrl.u32 %v781, 7
    %v783 = vsub.s32 0, %v782
    %v784 = vrot.slane %v744, %v783
    %793 = vmatprep.subr.mxu0 0.0
    %794 = vmatpush1.msra.mxu0 %v705
    %795 = vmatprep.subr.mxu0 0.0
    %796 = vmatpush1.msra.mxu0 %v706
    %797 = vmatprep.subr.mxu0 0.0
    %798 = vmatpush1.msra.mxu0 %v707
    %799 = vmatprep.subr.mxu0 0.0
    %800 = vmatpush1.msra.mxu0 %v708
    %801 = vmatprep.subr.mxu0 0.0
    %802 = vmatpush1.msra.mxu0 0.0
    %803 = vmatprep.subr.mxu0 0.0
    %804 = vmatpush1.msra.mxu0 0.0
    %805 = vmatprep.subr.mxu0 0.0
    %806 = vmatpush1.msra.mxu0 0.0
    %807 = vmatprep.subr.mxu0 0.0
    %808 = vmatpush1.msra.mxu0 0.0
    %809 = vmatprep.subr.mxu0 0.0
    %810 = vmatpush1.msra.mxu0 0.0
    %811 = vmatprep.subr.mxu0 0.0
    %812 = vmatpush1.msra.mxu0 0.0
    %813 = vmatprep.subr.mxu0 0.0
    %814 = vmatpush1.msra.mxu0 0.0
    %815 = vmatprep.subr.mxu0 0.0
    %816 = vmatpush1.msra.mxu0 0.0
    %817 = vmatprep.subr.mxu0 0.0
    %818 = vmatpush1.msra.mxu0 0.0
    %819 = vmatprep.subr.mxu0 0.0
    %820 = vmatpush1.msra.mxu0 0.0
    %821 = vmatprep.subr.mxu0 0.0
    %822 = vmatpush1.msra.mxu0 0.0
    %823 = vmatprep.subr.mxu0 0.0
    %824 = vmatpush1.msra.mxu0 0.0
    %825 = vmatprep.subr.mxu0 0.0
    %826 = vmatpush1.msra.mxu0 0.0
    %827 = vmatprep.subr.mxu0 0.0
    %828 = vmatpush1.msra.mxu0 0.0
    %829 = vmatprep.subr.mxu0 0.0
    %830 = vmatpush1.msra.mxu0 0.0
    %831 = vmatprep.subr.mxu0 0.0
    %832 = vmatpush1.msra.mxu0 0.0
    %833 = vmatprep.subr.mxu0 0.0
    %834 = vmatpush1.msra.mxu0 0.0
    %835 = vmatprep.subr.mxu0 0.0
    %836 = vmatpush1.msra.mxu0 0.0
    %837 = vmatprep.subr.mxu0 0.0
    %838 = vmatpush1.msra.mxu0 0.0
    %839 = vmatprep.subr.mxu0 0.0
    %840 = vmatpush1.msra.mxu0 0.0
    %841 = vmatprep.subr.mxu0 0.0
    %842 = vmatpush1.msra.mxu0 0.0
    %843 = vmatprep.subr.mxu0 0.0
    %844 = vmatpush1.msra.mxu0 0.0
    %845 = vmatprep.subr.mxu0 0.0
    %846 = vmatpush1.msra.mxu0 0.0
    %847 = vmatprep.subr.mxu0 0.0
    %848 = vmatpush1.msra.mxu0 0.0
    %849 = vmatprep.subr.mxu0 0.0
    %850 = vmatpush1.msra.mxu0 0.0
    %851 = vmatprep.subr.mxu0 0.0
    %852 = vmatpush1.msra.mxu0 0.0
    %853 = vmatprep.subr.mxu0 0.0
    %854 = vmatpush1.msra.mxu0 0.0
    %855 = vmatprep.subr.mxu0 0.0
    %856 = vmatpush1.msra.mxu0 0.0
    %857 = vmatprep.mubr.f32.mxu0 0.0
    %858 = vmatmul.mubr.f32.gmra.mrb[0].mxu0 %v122
    %v859 = vpop.f32.mrb[0].mxu0
    %v860 = vadd.f32 %v756, %v859
    %v861 = vpop.f32.mrb[0].mxu0
    %862 = vdwg.mxu0
    %863 = vmatprep.subr.mxu0 0.0
    %864 = vmatpush1.msra.mxu0 %v709
    %865 = vmatprep.subr.mxu0 0.0
    %866 = vmatpush1.msra.mxu0 %v710
    %867 = vmatprep.subr.mxu0 0.0
    %868 = vmatpush1.msra.mxu0 %v711
    %869 = vmatprep.subr.mxu0 0.0
    %870 = vmatpush1.msra.mxu0 %v712
    %871 = vmatprep.subr.mxu0 0.0
    %872 = vmatpush1.msra.mxu0 0.0
    %873 = vmatprep.subr.mxu0 0.0
    %874 = vmatpush1.msra.mxu0 0.0
    %875 = vmatprep.subr.mxu0 0.0
    %876 = vmatpush1.msra.mxu0 0.0
    %877 = vmatprep.subr.mxu0 0.0
    %878 = vmatpush1.msra.mxu0 0.0
    %879 = vmatprep.subr.mxu0 0.0
    %880 = vmatpush1.msra.mxu0 0.0
    %881 = vmatprep.subr.mxu0 0.0
    %882 = vmatpush1.msra.mxu0 0.0
    %883 = vmatprep.subr.mxu0 0.0
    %884 = vmatpush1.msra.mxu0 0.0
    %885 = vmatprep.subr.mxu0 0.0
    %886 = vmatpush1.msra.mxu0 0.0
    %887 = vmatprep.subr.mxu0 0.0
    %888 = vmatpush1.msra.mxu0 0.0
    %889 = vmatprep.subr.mxu0 0.0
    %890 = vmatpush1.msra.mxu0 0.0
    %891 = vmatprep.subr.mxu0 0.0
    %892 = vmatpush1.msra.mxu0 0.0
    %893 = vmatprep.subr.mxu0 0.0
    %894 = vmatpush1.msra.mxu0 0.0
    %895 = vmatprep.subr.mxu0 0.0
    %896 = vmatpush1.msra.mxu0 0.0
    %897 = vmatprep.subr.mxu0 0.0
    %898 = vmatpush1.msra.mxu0 0.0
    %899 = vmatprep.subr.mxu0 0.0
    %900 = vmatpush1.msra.mxu0 0.0
    %901 = vmatprep.subr.mxu0 0.0
    %902 = vmatpush1.msra.mxu0 0.0
    %903 = vmatprep.subr.mxu0 0.0
    %904 = vmatpush1.msra.mxu0 0.0
    %905 = vmatprep.subr.mxu0 0.0
    %906 = vmatpush1.msra.mxu0 0.0
    %907 = vmatprep.subr.mxu0 0.0
    %908 = vmatpush1.msra.mxu0 0.0
    %909 = vmatprep.subr.mxu0 0.0
    %910 = vmatpush1.msra.mxu0 0.0
    %911 = vmatprep.subr.mxu0 0.0
    %912 = vmatpush1.msra.mxu0 0.0
    %913 = vmatprep.subr.mxu0 0.0
    %914 = vmatpush1.msra.mxu0 0.0
    %915 = vmatprep.subr.mxu0 0.0
    %916 = vmatpush1.msra.mxu0 0.0
    %917 = vmatprep.subr.mxu0 0.0
    %918 = vmatpush1.msra.mxu0 0.0
    %919 = vmatprep.subr.mxu0 0.0
    %920 = vmatpush1.msra.mxu0 0.0
    %921 = vmatprep.subr.mxu0 0.0
    %922 = vmatpush1.msra.mxu0 0.0
    %923 = vmatprep.subr.mxu0 0.0
    %924 = vmatpush1.msra.mxu0 0.0
    %925 = vmatprep.subr.mxu0 0.0
    %926 = vmatpush1.msra.mxu0 0.0
    %927 = vmatprep.mubr.f32.mxu0 0.0
    %928 = vmatmul.mubr.f32.gmra.mrb[0].mxu0 %v195
    %v929 = vpop.f32.mrb[0].mxu0
    %v930 = vadd.f32 %v760, %v929
    %v931 = vpop.f32.mrb[0].mxu0
    %932 = vdwg.mxu0
    %933 = vmatprep.subr.mxu0 0.0
    %934 = vmatpush1.msra.mxu0 %v713
    %935 = vmatprep.subr.mxu0 0.0
    %936 = vmatpush1.msra.mxu0 %v714
    %937 = vmatprep.subr.mxu0 0.0
    %938 = vmatpush1.msra.mxu0 %v715
    %939 = vmatprep.subr.mxu0 0.0
    %940 = vmatpush1.msra.mxu0 %v716
    %941 = vmatprep.subr.mxu0 0.0
    %942 = vmatpush1.msra.mxu0 0.0
    %943 = vmatprep.subr.mxu0 0.0
    %944 = vmatpush1.msra.mxu0 0.0
    %945 = vmatprep.subr.mxu0 0.0
    %946 = vmatpush1.msra.mxu0 0.0
    %947 = vmatprep.subr.mxu0 0.0
    %948 = vmatpush1.msra.mxu0 0.0
    %949 = vmatprep.subr.mxu0 0.0
    %950 = vmatpush1.msra.mxu0 0.0
    %951 = vmatprep.subr.mxu0 0.0
    %952 = vmatpush1.msra.mxu0 0.0
    %953 = vmatprep.subr.mxu0 0.0
    %954 = vmatpush1.msra.mxu0 0.0
    %955 = vmatprep.subr.mxu0 0.0
    %956 = vmatpush1.msra.mxu0 0.0
    %957 = vmatprep.subr.mxu0 0.0
    %958 = vmatpush1.msra.mxu0 0.0
    %959 = vmatprep.subr.mxu0 0.0
    %960 = vmatpush1.msra.mxu0 0.0
    %961 = vmatprep.subr.mxu0 0.0
    %962 = vmatpush1.msra.mxu0 0.0
    %963 = vmatprep.subr.mxu0 0.0
    %964 = vmatpush1.msra.mxu0 0.0
    %965 = vmatprep.subr.mxu0 0.0
    %966 = vmatpush1.msra.mxu0 0.0
    %967 = vmatprep.subr.mxu0 0.0
    %968 = vmatpush1.msra.mxu0 0.0
    %969 = vmatprep.subr.mxu0 0.0
    %970 = vmatpush1.msra.mxu0 0.0
    %971 = vmatprep.subr.mxu0 0.0
    %972 = vmatpush1.msra.mxu0 0.0
    %973 = vmatprep.subr.mxu0 0.0
    %974 = vmatpush1.msra.mxu0 0.0
    %975 = vmatprep.subr.mxu0 0.0
    %976 = vmatpush1.msra.mxu0 0.0
    %977 = vmatprep.subr.mxu0 0.0
    %978 = vmatpush1.msra.mxu0 0.0
    %979 = vmatprep.subr.mxu0 0.0
    %980 = vmatpush1.msra.mxu0 0.0
    %981 = vmatprep.subr.mxu0 0.0
    %982 = vmatpush1.msra.mxu0 0.0
    %983 = vmatprep.subr.mxu0 0.0
    %984 = vmatpush1.msra.mxu0 0.0
    %985 = vmatprep.subr.mxu0 0.0
    %986 = vmatpush1.msra.mxu0 0.0
    %987 = vmatprep.subr.mxu0 0.0
    %988 = vmatpush1.msra.mxu0 0.0
    %989 = vmatprep.subr.mxu0 0.0
    %990 = vmatpush1.msra.mxu0 0.0
    %991 = vmatprep.subr.mxu0 0.0
    %992 = vmatpush1.msra.mxu0 0.0
    %993 = vmatprep.subr.mxu0 0.0
    %994 = vmatpush1.msra.mxu0 0.0
    %995 = vmatprep.subr.mxu0 0.0
    %996 = vmatpush1.msra.mxu0 0.0
    %997 = vmatprep.mubr.f32.mxu0 0.0
    %998 = vmatmul.mubr.f32.gmra.mrb[0].mxu0 %v268
    %v999 = vpop.f32.mrb[0].mxu0
    %v1000 = vadd.f32 %v764, %v999
    %v1001 = vpop.f32.mrb[0].mxu0
    %1002 = vdwg.mxu0
    %1003 = vmatprep.subr.mxu0 0.0
    %1004 = vmatpush1.msra.mxu0 %v717
    %1005 = vmatprep.subr.mxu0 0.0
    %1006 = vmatpush1.msra.mxu0 %v718
    %1007 = vmatprep.subr.mxu0 0.0
    %1008 = vmatpush1.msra.mxu0 %v719
    %1009 = vmatprep.subr.mxu0 0.0
    %1010 = vmatpush1.msra.mxu0 %v720
    %1011 = vmatprep.subr.mxu0 0.0
    %1012 = vmatpush1.msra.mxu0 0.0
    %1013 = vmatprep.subr.mxu0 0.0
    %1014 = vmatpush1.msra.mxu0 0.0
    %1015 = vmatprep.subr.mxu0 0.0
    %1016 = vmatpush1.msra.mxu0 0.0
    %1017 = vmatprep.subr.mxu0 0.0
    %1018 = vmatpush1.msra.mxu0 0.0
    %1019 = vmatprep.subr.mxu0 0.0
    %1020 = vmatpush1.msra.mxu0 0.0
    %1021 = vmatprep.subr.mxu0 0.0
    %1022 = vmatpush1.msra.mxu0 0.0
    %1023 = vmatprep.subr.mxu0 0.0
    %1024 = vmatpush1.msra.mxu0 0.0
    %1025 = vmatprep.subr.mxu0 0.0
    %1026 = vmatpush1.msra.mxu0 0.0
    %1027 = vmatprep.subr.mxu0 0.0
    %1028 = vmatpush1.msra.mxu0 0.0
    %1029 = vmatprep.subr.mxu0 0.0
    %1030 = vmatpush1.msra.mxu0 0.0
    %1031 = vmatprep.subr.mxu0 0.0
    %1032 = vmatpush1.msra.mxu0 0.0
    %1033 = vmatprep.subr.mxu0 0.0
    %1034 = vmatpush1.msra.mxu0 0.0
    %1035 = vmatprep.subr.mxu0 0.0
    %1036 = vmatpush1.msra.mxu0 0.0
    %1037 = vmatprep.subr.mxu0 0.0
    %1038 = vmatpush1.msra.mxu0 0.0
    %1039 = vmatprep.subr.mxu0 0.0
    %1040 = vmatpush1.msra.mxu0 0.0
    %1041 = vmatprep.subr.mxu0 0.0
    %1042 = vmatpush1.msra.mxu0 0.0
    %1043 = vmatprep.subr.mxu0 0.0
    %1044 = vmatpush1.msra.mxu0 0.0
    %1045 = vmatprep.subr.mxu0 0.0
    %1046 = vmatpush1.msra.mxu0 0.0
    %1047 = vmatprep.subr.mxu0 0.0
    %1048 = vmatpush1.msra.mxu0 0.0
    %1049 = vmatprep.subr.mxu0 0.0
    %1050 = vmatpush1.msra.mxu0 0.0
    %1051 = vmatprep.subr.mxu0 0.0
    %1052 = vmatpush1.msra.mxu0 0.0
    %1053 = vmatprep.subr.mxu0 0.0
    %1054 = vmatpush1.msra.mxu0 0.0
    %1055 = vmatprep.subr.mxu0 0.0
    %1056 = vmatpush1.msra.mxu0 0.0
    %1057 = vmatprep.subr.mxu0 0.0
    %1058 = vmatpush1.msra.mxu0 0.0
    %1059 = vmatprep.subr.mxu0 0.0
    %1060 = vmatpush1.msra.mxu0 0.0
    %1061 = vmatprep.subr.mxu0 0.0
    %1062 = vmatpush1.msra.mxu0 0.0
    %1063 = vmatprep.subr.mxu0 0.0
    %1064 = vmatpush1.msra.mxu0 0.0
    %1065 = vmatprep.subr.mxu0 0.0
    %1066 = vmatpush1.msra.mxu0 0.0
    %1067 = vmatprep.mubr.f32.mxu0 0.0
    %1068 = vmatmul.mubr.f32.gmra.mrb[0].mxu0 %v341
    %v1069 = vpop.f32.mrb[0].mxu0
    %v1070 = vadd.f32 %v768, %v1069
    %v1071 = vpop.f32.mrb[0].mxu0
    %1072 = vdwg.mxu0
    %1073 = vmatprep.subr.mxu0 0.0
    %1074 = vmatpush1.msra.mxu0 %v721
    %1075 = vmatprep.subr.mxu0 0.0
    %1076 = vmatpush1.msra.mxu0 %v722
    %1077 = vmatprep.subr.mxu0 0.0
    %1078 = vmatpush1.msra.mxu0 %v723
    %1079 = vmatprep.subr.mxu0 0.0
    %1080 = vmatpush1.msra.mxu0 %v724
    %1081 = vmatprep.subr.mxu0 0.0
    %1082 = vmatpush1.msra.mxu0 0.0
    %1083 = vmatprep.subr.mxu0 0.0
    %1084 = vmatpush1.msra.mxu0 0.0
    %1085 = vmatprep.subr.mxu0 0.0
    %1086 = vmatpush1.msra.mxu0 0.0
    %1087 = vmatprep.subr.mxu0 0.0
    %1088 = vmatpush1.msra.mxu0 0.0
    %1089 = vmatprep.subr.mxu0 0.0
    %1090 = vmatpush1.msra.mxu0 0.0
    %1091 = vmatprep.subr.mxu0 0.0
    %1092 = vmatpush1.msra.mxu0 0.0
    %1093 = vmatprep.subr.mxu0 0.0
    %1094 = vmatpush1.msra.mxu0 0.0
    %1095 = vmatprep.subr.mxu0 0.0
    %1096 = vmatpush1.msra.mxu0 0.0
    %1097 = vmatprep.subr.mxu0 0.0
    %1098 = vmatpush1.msra.mxu0 0.0
    %1099 = vmatprep.subr.mxu0 0.0
    %1100 = vmatpush1.msra.mxu0 0.0
    %1101 = vmatprep.subr.mxu0 0.0
    %1102 = vmatpush1.msra.mxu0 0.0
    %1103 = vmatprep.subr.mxu0 0.0
    %1104 = vmatpush1.msra.mxu0 0.0
    %1105 = vmatprep.subr.mxu0 0.0
    %1106 = vmatpush1.msra.mxu0 0.0
    %1107 = vmatprep.subr.mxu0 0.0
    %1108 = vmatpush1.msra.mxu0 0.0
    %1109 = vmatprep.subr.mxu0 0.0
    %1110 = vmatpush1.msra.mxu0 0.0
    %1111 = vmatprep.subr.mxu0 0.0
    %1112 = vmatpush1.msra.mxu0 0.0
    %1113 = vmatprep.subr.mxu0 0.0
    %1114 = vmatpush1.msra.mxu0 0.0
    %1115 = vmatprep.subr.mxu0 0.0
    %1116 = vmatpush1.msra.mxu0 0.0
    %1117 = vmatprep.subr.mxu0 0.0
    %1118 = vmatpush1.msra.mxu0 0.0
    %1119 = vmatprep.subr.mxu0 0.0
    %1120 = vmatpush1.msra.mxu0 0.0
    %1121 = vmatprep.subr.mxu0 0.0
    %1122 = vmatpush1.msra.mxu0 0.0
    %1123 = vmatprep.subr.mxu0 0.0
    %1124 = vmatpush1.msra.mxu0 0.0
    %1125 = vmatprep.subr.mxu0 0.0
    %1126 = vmatpush1.msra.mxu0 0.0
    %1127 = vmatprep.subr.mxu0 0.0
    %1128 = vmatpush1.msra.mxu0 0.0
    %1129 = vmatprep.subr.mxu0 0.0
    %1130 = vmatpush1.msra.mxu0 0.0
    %1131 = vmatprep.subr.mxu0 0.0
    %1132 = vmatpush1.msra.mxu0 0.0
    %1133 = vmatprep.subr.mxu0 0.0
    %1134 = vmatpush1.msra.mxu0 0.0
    %1135 = vmatprep.subr.mxu0 0.0
    %1136 = vmatpush1.msra.mxu0 0.0
    %1137 = vmatprep.mubr.f32.mxu0 0.0
    %1138 = vmatmul.mubr.f32.gmra.mrb[0].mxu0 %v414
    %v1139 = vpop.f32.mrb[0].mxu0
    %v1140 = vadd.f32 %v772, %v1139
    %v1141 = vpop.f32.mrb[0].mxu0
    %1142 = vdwg.mxu0
    %1143 = vmatprep.subr.mxu0 0.0
    %1144 = vmatpush1.msra.mxu0 %v725
    %1145 = vmatprep.subr.mxu0 0.0
    %1146 = vmatpush1.msra.mxu0 %v726
    %1147 = vmatprep.subr.mxu0 0.0
    %1148 = vmatpush1.msra.mxu0 %v727
    %1149 = vmatprep.subr.mxu0 0.0
    %1150 = vmatpush1.msra.mxu0 %v728
    %1151 = vmatprep.subr.mxu0 0.0
    %1152 = vmatpush1.msra.mxu0 0.0
    %1153 = vmatprep.subr.mxu0 0.0
    %1154 = vmatpush1.msra.mxu0 0.0
    %1155 = vmatprep.subr.mxu0 0.0
    %1156 = vmatpush1.msra.mxu0 0.0
    %1157 = vmatprep.subr.mxu0 0.0
    %1158 = vmatpush1.msra.mxu0 0.0
    %1159 = vmatprep.subr.mxu0 0.0
    %1160 = vmatpush1.msra.mxu0 0.0
    %1161 = vmatprep.subr.mxu0 0.0
    %1162 = vmatpush1.msra.mxu0 0.0
    %1163 = vmatprep.subr.mxu0 0.0
    %1164 = vmatpush1.msra.mxu0 0.0
    %1165 = vmatprep.subr.mxu0 0.0
    %1166 = vmatpush1.msra.mxu0 0.0
    %1167 = vmatprep.subr.mxu0 0.0
    %1168 = vmatpush1.msra.mxu0 0.0
    %1169 = vmatprep.subr.mxu0 0.0
    %1170 = vmatpush1.msra.mxu0 0.0
    %1171 = vmatprep.subr.mxu0 0.0
    %1172 = vmatpush1.msra.mxu0 0.0
    %1173 = vmatprep.subr.mxu0 0.0
    %1174 = vmatpush1.msra.mxu0 0.0
    %1175 = vmatprep.subr.mxu0 0.0
    %1176 = vmatpush1.msra.mxu0 0.0
    %1177 = vmatprep.subr.mxu0 0.0
    %1178 = vmatpush1.msra.mxu0 0.0
    %1179 = vmatprep.subr.mxu0 0.0
    %1180 = vmatpush1.msra.mxu0 0.0
    %1181 = vmatprep.subr.mxu0 0.0
    %1182 = vmatpush1.msra.mxu0 0.0
    %1183 = vmatprep.subr.mxu0 0.0
    %1184 = vmatpush1.msra.mxu0 0.0
    %1185 = vmatprep.subr.mxu0 0.0
    %1186 = vmatpush1.msra.mxu0 0.0
    %1187 = vmatprep.subr.mxu0 0.0
    %1188 = vmatpush1.msra.mxu0 0.0
    %1189 = vmatprep.subr.mxu0 0.0
    %1190 = vmatpush1.msra.mxu0 0.0
    %1191 = vmatprep.subr.mxu0 0.0
    %1192 = vmatpush1.msra.mxu0 0.0
    %1193 = vmatprep.subr.mxu0 0.0
    %1194 = vmatpush1.msra.mxu0 0.0
    %1195 = vmatprep.subr.mxu0 0.0
    %1196 = vmatpush1.msra.mxu0 0.0
    %1197 = vmatprep.subr.mxu0 0.0
    %1198 = vmatpush1.msra.mxu0 0.0
    %1199 = vmatprep.subr.mxu0 0.0
    %1200 = vmatpush1.msra.mxu0 0.0
    %1201 = vmatprep.subr.mxu0 0.0
    %1202 = vmatpush1.msra.mxu0 0.0
    %1203 = vmatprep.subr.mxu0 0.0
    %1204 = vmatpush1.msra.mxu0 0.0
    %1205 = vmatprep.subr.mxu0 0.0
    %1206 = vmatpush1.msra.mxu0 0.0
    %1207 = vmatprep.mubr.f32.mxu0 0.0
    %1208 = vmatmul.mubr.f32.gmra.mrb[0].mxu0 %v487
    %v1209 = vpop.f32.mrb[0].mxu0
    %v1210 = vadd.f32 %v776, %v1209
    %v1211 = vpop.f32.mrb[0].mxu0
    %1212 = vdwg.mxu0
    %1213 = vmatprep.subr.mxu0 0.0
    %1214 = vmatpush1.msra.mxu0 %v729
    %1215 = vmatprep.subr.mxu0 0.0
    %1216 = vmatpush1.msra.mxu0 %v730
    %1217 = vmatprep.subr.mxu0 0.0
    %1218 = vmatpush1.msra.mxu0 %v731
    %1219 = vmatprep.subr.mxu0 0.0
    %1220 = vmatpush1.msra.mxu0 %v732
    %1221 = vmatprep.subr.mxu0 0.0
    %1222 = vmatpush1.msra.mxu0 0.0
    %1223 = vmatprep.subr.mxu0 0.0
    %1224 = vmatpush1.msra.mxu0 0.0
    %1225 = vmatprep.subr.mxu0 0.0
    %1226 = vmatpush1.msra.mxu0 0.0
    %1227 = vmatprep.subr.mxu0 0.0
    %1228 = vmatpush1.msra.mxu0 0.0
    %1229 = vmatprep.subr.mxu0 0.0
    %1230 = vmatpush1.msra.mxu0 0.0
    %1231 = vmatprep.subr.mxu0 0.0
    %1232 = vmatpush1.msra.mxu0 0.0
    %1233 = vmatprep.subr.mxu0 0.0
    %1234 = vmatpush1.msra.mxu0 0.0
    %1235 = vmatprep.subr.mxu0 0.0
    %1236 = vmatpush1.msra.mxu0 0.0
    %1237 = vmatprep.subr.mxu0 0.0
    %1238 = vmatpush1.msra.mxu0 0.0
    %1239 = vmatprep.subr.mxu0 0.0
    %1240 = vmatpush1.msra.mxu0 0.0
    %1241 = vmatprep.subr.mxu0 0.0
    %1242 = vmatpush1.msra.mxu0 0.0
    %1243 = vmatprep.subr.mxu0 0.0
    %1244 = vmatpush1.msra.mxu0 0.0
    %1245 = vmatprep.subr.mxu0 0.0
    %1246 = vmatpush1.msra.mxu0 0.0
    %1247 = vmatprep.subr.mxu0 0.0
    %1248 = vmatpush1.msra.mxu0 0.0
    %1249 = vmatprep.subr.mxu0 0.0
    %1250 = vmatpush1.msra.mxu0 0.0
    %1251 = vmatprep.subr.mxu0 0.0
    %1252 = vmatpush1.msra.mxu0 0.0
    %1253 = vmatprep.subr.mxu0 0.0
    %1254 = vmatpush1.msra.mxu0 0.0
    %1255 = vmatprep.subr.mxu0 0.0
    %1256 = vmatpush1.msra.mxu0 0.0
    %1257 = vmatprep.subr.mxu0 0.0
    %1258 = vmatpush1.msra.mxu0 0.0
    %1259 = vmatprep.subr.mxu0 0.0
    %1260 = vmatpush1.msra.mxu0 0.0
    %1261 = vmatprep.subr.mxu0 0.0
    %1262 = vmatpush1.msra.mxu0 0.0
    %1263 = vmatprep.subr.mxu0 0.0
    %1264 = vmatpush1.msra.mxu0 0.0
    %1265 = vmatprep.subr.mxu0 0.0
    %1266 = vmatpush1.msra.mxu0 0.0
    %1267 = vmatprep.subr.mxu0 0.0
    %1268 = vmatpush1.msra.mxu0 0.0
    %1269 = vmatprep.subr.mxu0 0.0
    %1270 = vmatpush1.msra.mxu0 0.0
    %1271 = vmatprep.subr.mxu0 0.0
    %1272 = vmatpush1.msra.mxu0 0.0
    %1273 = vmatprep.subr.mxu0 0.0
    %1274 = vmatpush1.msra.mxu0 0.0
    %1275 = vmatprep.subr.mxu0 0.0
    %1276 = vmatpush1.msra.mxu0 0.0
    %1277 = vmatprep.mubr.f32.mxu0 0.0
    %1278 = vmatmul.mubr.f32.gmra.mrb[0].mxu0 %v560
    %v1279 = vpop.f32.mrb[0].mxu0
    %v1280 = vadd.f32 %v780, %v1279
    %v1281 = vpop.f32.mrb[0].mxu0
    %1282 = vdwg.mxu0
    %1283 = vmatprep.subr.mxu0 0.0
    %1284 = vmatpush1.msra.mxu0 %v733
    %1285 = vmatprep.subr.mxu0 0.0
    %1286 = vmatpush1.msra.mxu0 %v734
    %1287 = vmatprep.subr.mxu0 0.0
    %1288 = vmatpush1.msra.mxu0 %v735
    %1289 = vmatprep.subr.mxu0 0.0
    %1290 = vmatpush1.msra.mxu0 %v736
    %1291 = vmatprep.subr.mxu0 0.0
    %1292 = vmatpush1.msra.mxu0 0.0
    %1293 = vmatprep.subr.mxu0 0.0
    %1294 = vmatpush1.msra.mxu0 0.0
    %1295 = vmatprep.subr.mxu0 0.0
    %1296 = vmatpush1.msra.mxu0 0.0
    %1297 = vmatprep.subr.mxu0 0.0
    %1298 = vmatpush1.msra.mxu0 0.0
    %1299 = vmatprep.subr.mxu0 0.0
    %1300 = vmatpush1.msra.mxu0 0.0
    %1301 = vmatprep.subr.mxu0 0.0
    %1302 = vmatpush1.msra.mxu0 0.0
    %1303 = vmatprep.subr.mxu0 0.0
    %1304 = vmatpush1.msra.mxu0 0.0
    %1305 = vmatprep.subr.mxu0 0.0
    %1306 = vmatpush1.msra.mxu0 0.0
    %1307 = vmatprep.subr.mxu0 0.0
    %1308 = vmatpush1.msra.mxu0 0.0
    %1309 = vmatprep.subr.mxu0 0.0
    %1310 = vmatpush1.msra.mxu0 0.0
    %1311 = vmatprep.subr.mxu0 0.0
    %1312 = vmatpush1.msra.mxu0 0.0
    %1313 = vmatprep.subr.mxu0 0.0
    %1314 = vmatpush1.msra.mxu0 0.0
    %1315 = vmatprep.subr.mxu0 0.0
    %1316 = vmatpush1.msra.mxu0 0.0
    %1317 = vmatprep.subr.mxu0 0.0
    %1318 = vmatpush1.msra.mxu0 0.0
    %1319 = vmatprep.subr.mxu0 0.0
    %1320 = vmatpush1.msra.mxu0 0.0
    %1321 = vmatprep.subr.mxu0 0.0
    %1322 = vmatpush1.msra.mxu0 0.0
    %1323 = vmatprep.subr.mxu0 0.0
    %1324 = vmatpush1.msra.mxu0 0.0
    %1325 = vmatprep.subr.mxu0 0.0
    %1326 = vmatpush1.msra.mxu0 0.0
    %1327 = vmatprep.subr.mxu0 0.0
    %1328 = vmatpush1.msra.mxu0 0.0
    %1329 = vmatprep.subr.mxu0 0.0
    %1330 = vmatpush1.msra.mxu0 0.0
    %1331 = vmatprep.subr.mxu0 0.0
    %1332 = vmatpush1.msra.mxu0 0.0
    %1333 = vmatprep.subr.mxu0 0.0
    %1334 = vmatpush1.msra.mxu0 0.0
    %1335 = vmatprep.subr.mxu0 0.0
    %1336 = vmatpush1.msra.mxu0 0.0
    %1337 = vmatprep.subr.mxu0 0.0
    %1338 = vmatpush1.msra.mxu0 0.0
    %1339 = vmatprep.subr.mxu0 0.0
    %1340 = vmatpush1.msra.mxu0 0.0
    %1341 = vmatprep.subr.mxu0 0.0
    %1342 = vmatpush1.msra.mxu0 0.0
    %1343 = vmatprep.subr.mxu0 0.0
    %1344 = vmatpush1.msra.mxu0 0.0
    %1345 = vmatprep.subr.mxu0 0.0
    %1346 = vmatpush1.msra.mxu0 0.0
    %1347 = vmatprep.mubr.f32.mxu0 0.0
    %1348 = vmatmul.mubr.f32.gmra.mrb[0].mxu0 %v633
    %v1349 = vpop.f32.mrb[0].mxu0
    %v1350 = vadd.f32 %v784, %v1349
    %v1351 = vpop.f32.mrb[0].mxu0
    %1352 = vdwg.mxu0
    %vm1353 = vcmask 64512
    %v1355 = vsel %vm1353, %v191, 0
    %v1358 = vsel %vm1353, %v860, 0
    %1360 = vmatprep.subr.mxu0 0.0
    %1361 = vmatpush1.xpose.msra.mxu0 %v1358
    %1362 = vmatprep.subr.mxu0 0.0
    %1363 = vmatpush1.xpose.msra.mxu0 0.0
    %1364 = vmatprep.subr.mxu0 0.0
    %1365 = vmatpush1.xpose.msra.mxu0 0.0
    %1366 = vmatprep.subr.mxu0 0.0
    %1367 = vmatpush1.xpose.msra.mxu0 0.0
    %1368 = vmatprep.subr.mxu0 0.0
    %1369 = vmatpush1.xpose.msra.mxu0 0.0
    %1370 = vmatprep.subr.mxu0 0.0
    %1371 = vmatpush1.xpose.msra.mxu0 0.0
    %1372 = vmatprep.subr.mxu0 0.0
    %1373 = vmatpush1.xpose.msra.mxu0 0.0
    %1374 = vmatprep.subr.mxu0 0.0
    %1375 = vmatpush1.xpose.msra.mxu0 0.0
    %1376 = vmatprep.subr.mxu0 0.0
    %1377 = vmatpush1.xpose.msra.mxu0 0.0
    %1378 = vmatprep.subr.mxu0 0.0
    %1379 = vmatpush1.xpose.msra.mxu0 0.0
    %1380 = vmatprep.subr.mxu0 0.0
    %1381 = vmatpush1.xpose.msra.mxu0 0.0
    %1382 = vmatprep.subr.mxu0 0.0
    %1383 = vmatpush1.xpose.msra.mxu0 0.0
    %1384 = vmatprep.subr.mxu0 0.0
    %1385 = vmatpush1.xpose.msra.mxu0 0.0
    %1386 = vmatprep.subr.mxu0 0.0
    %1387 = vmatpush1.xpose.msra.mxu0 0.0
    %1388 = vmatprep.subr.mxu0 0.0
    %1389 = vmatpush1.xpose.msra.mxu0 0.0
    %1390 = vmatprep.subr.mxu0 0.0
    %1391 = vmatpush1.xpose.msra.mxu0 0.0
    %1392 = vmatprep.subr.mxu0 0.0
    %1393 = vmatpush1.xpose.msra.mxu0 0.0
    %1394 = vmatprep.subr.mxu0 0.0
    %1395 = vmatpush1.xpose.msra.mxu0 0.0
    %1396 = vmatprep.subr.mxu0 0.0
    %1397 = vmatpush1.xpose.msra.mxu0 0.0
    %1398 = vmatprep.subr.mxu0 0.0
    %1399 = vmatpush1.xpose.msra.mxu0 0.0
    %1400 = vmatprep.subr.mxu0 0.0
    %1401 = vmatpush1.xpose.msra.mxu0 0.0
    %1402 = vmatprep.subr.mxu0 0.0
    %1403 = vmatpush1.xpose.msra.mxu0 0.0
    %1404 = vmatprep.subr.mxu0 0.0
    %1405 = vmatpush1.xpose.msra.mxu0 0.0
    %1406 = vmatprep.subr.mxu0 0.0
    %1407 = vmatpush1.xpose.msra.mxu0 0.0
    %1408 = vmatprep.subr.mxu0 0.0
    %1409 = vmatpush1.xpose.msra.mxu0 0.0
    %1410 = vmatprep.subr.mxu0 0.0
    %1411 = vmatpush1.xpose.msra.mxu0 0.0
    %1412 = vmatprep.subr.mxu0 0.0
    %1413 = vmatpush1.xpose.msra.mxu0 0.0
    %1414 = vmatprep.subr.mxu0 0.0
    %1415 = vmatpush1.xpose.msra.mxu0 0.0
    %1416 = vmatprep.subr.mxu0 0.0
    %1417 = vmatpush1.xpose.msra.mxu0 0.0
    %1418 = vmatprep.subr.mxu0 0.0
    %1419 = vmatpush1.xpose.msra.mxu0 0.0
    %1420 = vmatprep.subr.mxu0 0.0
    %1421 = vmatpush1.xpose.msra.mxu0 0.0
    %1422 = vmatprep.subr.mxu0 0.0
    %1423 = vmatpush1.xpose.msra.mxu0 0.0
    %1424 = vmatprep.mubr.f32.mxu0 0.0
    %1425 = vmatmul.mubr.f32.gmra.mrb[0].mxu0 %v1355
    %v1426 = vpop.f32.mrb[0].mxu0
    %v1427 = vadd.f32 0.0, %v1426
    %v1428 = vpop.f32.mrb[0].mxu0
    %1429 = vdwg.mxu0
    %v1431 = vsel %vm1353, %v264, 0
    %v1434 = vsel %vm1353, %v930, 0
    %1436 = vmatprep.subr.mxu0 0.0
    %1437 = vmatpush1.xpose.msra.mxu0 %v1434
    %1438 = vmatprep.subr.mxu0 0.0
    %1439 = vmatpush1.xpose.msra.mxu0 0.0
    %1440 = vmatprep.subr.mxu0 0.0
    %1441 = vmatpush1.xpose.msra.mxu0 0.0
    %1442 = vmatprep.subr.mxu0 0.0
    %1443 = vmatpush1.xpose.msra.mxu0 0.0
    %1444 = vmatprep.subr.mxu0 0.0
    %1445 = vmatpush1.xpose.msra.mxu0 0.0
    %1446 = vmatprep.subr.mxu0 0.0
    %1447 = vmatpush1.xpose.msra.mxu0 0.0
    %1448 = vmatprep.subr.mxu0 0.0
    %1449 = vmatpush1.xpose.msra.mxu0 0.0
    %1450 = vmatprep.subr.mxu0 0.0
    %1451 = vmatpush1.xpose.msra.mxu0 0.0
    %1452 = vmatprep.subr.mxu0 0.0
    %1453 = vmatpush1.xpose.msra.mxu0 0.0
    %1454 = vmatprep.subr.mxu0 0.0
    %1455 = vmatpush1.xpose.msra.mxu0 0.0
    %1456 = vmatprep.subr.mxu0 0.0
    %1457 = vmatpush1.xpose.msra.mxu0 0.0
    %1458 = vmatprep.subr.mxu0 0.0
    %1459 = vmatpush1.xpose.msra.mxu0 0.0
    %1460 = vmatprep.subr.mxu0 0.0
    %1461 = vmatpush1.xpose.msra.mxu0 0.0
    %1462 = vmatprep.subr.mxu0 0.0
    %1463 = vmatpush1.xpose.msra.mxu0 0.0
    %1464 = vmatprep.subr.mxu0 0.0
    %1465 = vmatpush1.xpose.msra.mxu0 0.0
    %1466 = vmatprep.subr.mxu0 0.0
    %1467 = vmatpush1.xpose.msra.mxu0 0.0
    %1468 = vmatprep.subr.mxu0 0.0
    %1469 = vmatpush1.xpose.msra.mxu0 0.0
    %1470 = vmatprep.subr.mxu0 0.0
    %1471 = vmatpush1.xpose.msra.mxu0 0.0
    %1472 = vmatprep.subr.mxu0 0.0
    %1473 = vmatpush1.xpose.msra.mxu0 0.0
    %1474 = vmatprep.subr.mxu0 0.0
    %1475 = vmatpush1.xpose.msra.mxu0 0.0
    %1476 = vmatprep.subr.mxu0 0.0
    %1477 = vmatpush1.xpose.msra.mxu0 0.0
    %1478 = vmatprep.subr.mxu0 0.0
    %1479 = vmatpush1.xpose.msra.mxu0 0.0
    %1480 = vmatprep.subr.mxu0 0.0
    %1481 = vmatpush1.xpose.msra.mxu0 0.0
    %1482 = vmatprep.subr.mxu0 0.0
    %1483 = vmatpush1.xpose.msra.mxu0 0.0
    %1484 = vmatprep.subr.mxu0 0.0
    %1485 = vmatpush1.xpose.msra.mxu0 0.0
    %1486 = vmatprep.subr.mxu0 0.0
    %1487 = vmatpush1.xpose.msra.mxu0 0.0
    %1488 = vmatprep.subr.mxu0 0.0
    %1489 = vmatpush1.xpose.msra.mxu0 0.0
    %1490 = vmatprep.subr.mxu0 0.0
    %1491 = vmatpush1.xpose.msra.mxu0 0.0
    %1492 = vmatprep.subr.mxu0 0.0
    %1493 = vmatpush1.xpose.msra.mxu0 0.0
    %1494 = vmatprep.subr.mxu0 0.0
    %1495 = vmatpush1.xpose.msra.mxu0 0.0
    %1496 = vmatprep.subr.mxu0 0.0
    %1497 = vmatpush1.xpose.msra.mxu0 0.0
    %1498 = vmatprep.subr.mxu0 0.0
    %1499 = vmatpush1.xpose.msra.mxu0 0.0
    %1500 = vmatprep.mubr.f32.mxu0 0.0
    %1501 = vmatmul.mubr.f32.gmra.mrb[0].mxu0 %v1431
    %v1502 = vpop.f32.mrb[0].mxu0
    %v1503 = vadd.f32 0.0, %v1502
    %v1504 = vpop.f32.mrb[0].mxu0
    %1505 = vdwg.mxu0
    %v1507 = vsel %vm1353, %v337, 0
    %v1510 = vsel %vm1353, %v1000, 0
    %1512 = vmatprep.subr.mxu0 0.0
    %1513 = vmatpush1.xpose.msra.mxu0 %v1510
    %1514 = vmatprep.subr.mxu0 0.0
    %1515 = vmatpush1.xpose.msra.mxu0 0.0
    %1516 = vmatprep.subr.mxu0 0.0
    %1517 = vmatpush1.xpose.msra.mxu0 0.0
    %1518 = vmatprep.subr.mxu0 0.0
    %1519 = vmatpush1.xpose.msra.mxu0 0.0
    %1520 = vmatprep.subr.mxu0 0.0
    %1521 = vmatpush1.xpose.msra.mxu0 0.0
    %1522 = vmatprep.subr.mxu0 0.0
    %1523 = vmatpush1.xpose.msra.mxu0 0.0
    %1524 = vmatprep.subr.mxu0 0.0
    %1525 = vmatpush1.xpose.msra.mxu0 0.0
    %1526 = vmatprep.subr.mxu0 0.0
    %1527 = vmatpush1.xpose.msra.mxu0 0.0
    %1528 = vmatprep.subr.mxu0 0.0
    %1529 = vmatpush1.xpose.msra.mxu0 0.0
    %1530 = vmatprep.subr.mxu0 0.0
    %1531 = vmatpush1.xpose.msra.mxu0 0.0
    %1532 = vmatprep.subr.mxu0 0.0
    %1533 = vmatpush1.xpose.msra.mxu0 0.0
    %1534 = vmatprep.subr.mxu0 0.0
    %1535 = vmatpush1.xpose.msra.mxu0 0.0
    %1536 = vmatprep.subr.mxu0 0.0
    %1537 = vmatpush1.xpose.msra.mxu0 0.0
    %1538 = vmatprep.subr.mxu0 0.0
    %1539 = vmatpush1.xpose.msra.mxu0 0.0
    %1540 = vmatprep.subr.mxu0 0.0
    %1541 = vmatpush1.xpose.msra.mxu0 0.0
    %1542 = vmatprep.subr.mxu0 0.0
    %1543 = vmatpush1.xpose.msra.mxu0 0.0
    %1544 = vmatprep.subr.mxu0 0.0
    %1545 = vmatpush1.xpose.msra.mxu0 0.0
    %1546 = vmatprep.subr.mxu0 0.0
    %1547 = vmatpush1.xpose.msra.mxu0 0.0
    %1548 = vmatprep.subr.mxu0 0.0
    %1549 = vmatpush1.xpose.msra.mxu0 0.0
    %1550 = vmatprep.subr.mxu0 0.0
    %1551 = vmatpush1.xpose.msra.mxu0 0.0
    %1552 = vmatprep.subr.mxu0 0.0
    %1553 = vmatpush1.xpose.msra.mxu0 0.0
    %1554 = vmatprep.subr.mxu0 0.0
    %1555 = vmatpush1.xpose.msra.mxu0 0.0
    %1556 = vmatprep.subr.mxu0 0.0
    %1557 = vmatpush1.xpose.msra.mxu0 0.0
    %1558 = vmatprep.subr.mxu0 0.0
    %1559 = vmatpush1.xpose.msra.mxu0 0.0
    %1560 = vmatprep.subr.mxu0 0.0
    %1561 = vmatpush1.xpose.msra.mxu0 0.0
    %1562 = vmatprep.subr.mxu0 0.0
    %1563 = vmatpush1.xpose.msra.mxu0 0.0
    %1564 = vmatprep.subr.mxu0 0.0
    %1565 = vmatpush1.xpose.msra.mxu0 0.0
    %1566 = vmatprep.subr.mxu0 0.0
    %1567 = vmatpush1.xpose.msra.mxu0 0.0
    %1568 = vmatprep.subr.mxu0 0.0
    %1569 = vmatpush1.xpose.msra.mxu0 0.0
    %1570 = vmatprep.subr.mxu0 0.0
    %1571 = vmatpush1.xpose.msra.mxu0 0.0
    %1572 = vmatprep.subr.mxu0 0.0
    %1573 = vmatpush1.xpose.msra.mxu0 0.0
    %1574 = vmatprep.subr.mxu0 0.0
    %1575 = vmatpush1.xpose.msra.mxu0 0.0
    %1576 = vmatprep.mubr.f32.mxu0 0.0
    %1577 = vmatmul.mubr.f32.gmra.mrb[0].mxu0 %v1507
    %v1578 = vpop.f32.mrb[0].mxu0
    %v1579 = vadd.f32 0.0, %v1578
    %v1580 = vpop.f32.mrb[0].mxu0
    %1581 = vdwg.mxu0
    %v1583 = vsel %vm1353, %v410, 0
    %v1586 = vsel %vm1353, %v1070, 0
    %1588 = vmatprep.subr.mxu0 0.0
    %1589 = vmatpush1.xpose.msra.mxu0 %v1586
    %1590 = vmatprep.subr.mxu0 0.0
    %1591 = vmatpush1.xpose.msra.mxu0 0.0
    %1592 = vmatprep.subr.mxu0 0.0
    %1593 = vmatpush1.xpose.msra.mxu0 0.0
    %1594 = vmatprep.subr.mxu0 0.0
    %1595 = vmatpush1.xpose.msra.mxu0 0.0
    %1596 = vmatprep.subr.mxu0 0.0
    %1597 = vmatpush1.xpose.msra.mxu0 0.0
    %1598 = vmatprep.subr.mxu0 0.0
    %1599 = vmatpush1.xpose.msra.mxu0 0.0
    %1600 = vmatprep.subr.mxu0 0.0
    %1601 = vmatpush1.xpose.msra.mxu0 0.0
    %1602 = vmatprep.subr.mxu0 0.0
    %1603 = vmatpush1.xpose.msra.mxu0 0.0
    %1604 = vmatprep.subr.mxu0 0.0
    %1605 = vmatpush1.xpose.msra.mxu0 0.0
    %1606 = vmatprep.subr.mxu0 0.0
    %1607 = vmatpush1.xpose.msra.mxu0 0.0
    %1608 = vmatprep.subr.mxu0 0.0
    %1609 = vmatpush1.xpose.msra.mxu0 0.0
    %1610 = vmatprep.subr.mxu0 0.0
    %1611 = vmatpush1.xpose.msra.mxu0 0.0
    %1612 = vmatprep.subr.mxu0 0.0
    %1613 = vmatpush1.xpose.msra.mxu0 0.0
    %1614 = vmatprep.subr.mxu0 0.0
    %1615 = vmatpush1.xpose.msra.mxu0 0.0
    %1616 = vmatprep.subr.mxu0 0.0
    %1617 = vmatpush1.xpose.msra.mxu0 0.0
    %1618 = vmatprep.subr.mxu0 0.0
    %1619 = vmatpush1.xpose.msra.mxu0 0.0
    %1620 = vmatprep.subr.mxu0 0.0
    %1621 = vmatpush1.xpose.msra.mxu0 0.0
    %1622 = vmatprep.subr.mxu0 0.0
    %1623 = vmatpush1.xpose.msra.mxu0 0.0
    %1624 = vmatprep.subr.mxu0 0.0
    %1625 = vmatpush1.xpose.msra.mxu0 0.0
    %1626 = vmatprep.subr.mxu0 0.0
    %1627 = vmatpush1.xpose.msra.mxu0 0.0
    %1628 = vmatprep.subr.mxu0 0.0
    %1629 = vmatpush1.xpose.msra.mxu0 0.0
    %1630 = vmatprep.subr.mxu0 0.0
    %1631 = vmatpush1.xpose.msra.mxu0 0.0
    %1632 = vmatprep.subr.mxu0 0.0
    %1633 = vmatpush1.xpose.msra.mxu0 0.0
    %1634 = vmatprep.subr.mxu0 0.0
    %1635 = vmatpush1.xpose.msra.mxu0 0.0
    %1636 = vmatprep.subr.mxu0 0.0
    %1637 = vmatpush1.xpose.msra.mxu0 0.0
    %1638 = vmatprep.subr.mxu0 0.0
    %1639 = vmatpush1.xpose.msra.mxu0 0.0
    %1640 = vmatprep.subr.mxu0 0.0
    %1641 = vmatpush1.xpose.msra.mxu0 0.0
    %1642 = vmatprep.subr.mxu0 0.0
    %1643 = vmatpush1.xpose.msra.mxu0 0.0
    %1644 = vmatprep.subr.mxu0 0.0
    %1645 = vmatpush1.xpose.msra.mxu0 0.0
    %1646 = vmatprep.subr.mxu0 0.0
    %1647 = vmatpush1.xpose.msra.mxu0 0.0
    %1648 = vmatprep.subr.mxu0 0.0
    %1649 = vmatpush1.xpose.msra.mxu0 0.0
    %1650 = vmatprep.subr.mxu0 0.0
    %1651 = vmatpush1.xpose.msra.mxu0 0.0
    %1652 = vmatprep.mubr.f32.mxu0 0.0
    %1653 = vmatmul.mubr.f32.gmra.mrb[0].mxu0 %v1583
    %v1654 = vpop.f32.mrb[0].mxu0
    %v1655 = vadd.f32 0.0, %v1654
    %v1656 = vpop.f32.mrb[0].mxu0
    %1657 = vdwg.mxu0
    %v1659 = vsel %vm1353, %v483, 0
    %v1662 = vsel %vm1353, %v1140, 0
    %1664 = vmatprep.subr.mxu0 0.0
    %1665 = vmatpush1.xpose.msra.mxu0 %v1662
    %1666 = vmatprep.subr.mxu0 0.0
    %1667 = vmatpush1.xpose.msra.mxu0 0.0
    %1668 = vmatprep.subr.mxu0 0.0
    %1669 = vmatpush1.xpose.msra.mxu0 0.0
    %1670 = vmatprep.subr.mxu0 0.0
    %1671 = vmatpush1.xpose.msra.mxu0 0.0
    %1672 = vmatprep.subr.mxu0 0.0
    %1673 = vmatpush1.xpose.msra.mxu0 0.0
    %1674 = vmatprep.subr.mxu0 0.0
    %1675 = vmatpush1.xpose.msra.mxu0 0.0
    %1676 = vmatprep.subr.mxu0 0.0
    %1677 = vmatpush1.xpose.msra.mxu0 0.0
    %1678 = vmatprep.subr.mxu0 0.0
    %1679 = vmatpush1.xpose.msra.mxu0 0.0
    %1680 = vmatprep.subr.mxu0 0.0
    %1681 = vmatpush1.xpose.msra.mxu0 0.0
    %1682 = vmatprep.subr.mxu0 0.0
    %1683 = vmatpush1.xpose.msra.mxu0 0.0
    %1684 = vmatprep.subr.mxu0 0.0
    %1685 = vmatpush1.xpose.msra.mxu0 0.0
    %1686 = vmatprep.subr.mxu0 0.0
    %1687 = vmatpush1.xpose.msra.mxu0 0.0
    %1688 = vmatprep.subr.mxu0 0.0
    %1689 = vmatpush1.xpose.msra.mxu0 0.0
    %1690 = vmatprep.subr.mxu0 0.0
    %1691 = vmatpush1.xpose.msra.mxu0 0.0
    %1692 = vmatprep.subr.mxu0 0.0
    %1693 = vmatpush1.xpose.msra.mxu0 0.0
    %1694 = vmatprep.subr.mxu0 0.0
    %1695 = vmatpush1.xpose.msra.mxu0 0.0
    %1696 = vmatprep.subr.mxu0 0.0
    %1697 = vmatpush1.xpose.msra.mxu0 0.0
    %1698 = vmatprep.subr.mxu0 0.0
    %1699 = vmatpush1.xpose.msra.mxu0 0.0
    %1700 = vmatprep.subr.mxu0 0.0
    %1701 = vmatpush1.xpose.msra.mxu0 0.0
    %1702 = vmatprep.subr.mxu0 0.0
    %1703 = vmatpush1.xpose.msra.mxu0 0.0
    %1704 = vmatprep.subr.mxu0 0.0
    %1705 = vmatpush1.xpose.msra.mxu0 0.0
    %1706 = vmatprep.subr.mxu0 0.0
    %1707 = vmatpush1.xpose.msra.mxu0 0.0
    %1708 = vmatprep.subr.mxu0 0.0
    %1709 = vmatpush1.xpose.msra.mxu0 0.0
    %1710 = vmatprep.subr.mxu0 0.0
    %1711 = vmatpush1.xpose.msra.mxu0 0.0
    %1712 = vmatprep.subr.mxu0 0.0
    %1713 = vmatpush1.xpose.msra.mxu0 0.0
    %1714 = vmatprep.subr.mxu0 0.0
    %1715 = vmatpush1.xpose.msra.mxu0 0.0
    %1716 = vmatprep.subr.mxu0 0.0
    %1717 = vmatpush1.xpose.msra.mxu0 0.0
    %1718 = vmatprep.subr.mxu0 0.0
    %1719 = vmatpush1.xpose.msra.mxu0 0.0
    %1720 = vmatprep.subr.mxu0 0.0
    %1721 = vmatpush1.xpose.msra.mxu0 0.0
    %1722 = vmatprep.subr.mxu0 0.0
    %1723 = vmatpush1.xpose.msra.mxu0 0.0
    %1724 = vmatprep.subr.mxu0 0.0
    %1725 = vmatpush1.xpose.msra.mxu0 0.0
    %1726 = vmatprep.subr.mxu0 0.0
    %1727 = vmatpush1.xpose.msra.mxu0 0.0
    %1728 = vmatprep.mubr.f32.mxu0 0.0
    %1729 = vmatmul.mubr.f32.gmra.mrb[0].mxu0 %v1659
    %v1730 = vpop.f32.mrb[0].mxu0
    %v1731 = vadd.f32 0.0, %v1730
    %v1732 = vpop.f32.mrb[0].mxu0
    %1733 = vdwg.mxu0
    %v1735 = vsel %vm1353, %v556, 0
    %v1738 = vsel %vm1353, %v1210, 0
    %1740 = vmatprep.subr.mxu0 0.0
    %1741 = vmatpush1.xpose.msra.mxu0 %v1738
    %1742 = vmatprep.subr.mxu0 0.0
    %1743 = vmatpush1.xpose.msra.mxu0 0.0
    %1744 = vmatprep.subr.mxu0 0.0
    %1745 = vmatpush1.xpose.msra.mxu0 0.0
    %1746 = vmatprep.subr.mxu0 0.0
    %1747 = vmatpush1.xpose.msra.mxu0 0.0
    %1748 = vmatprep.subr.mxu0 0.0
    %1749 = vmatpush1.xpose.msra.mxu0 0.0
    %1750 = vmatprep.subr.mxu0 0.0
    %1751 = vmatpush1.xpose.msra.mxu0 0.0
    %1752 = vmatprep.subr.mxu0 0.0
    %1753 = vmatpush1.xpose.msra.mxu0 0.0
    %1754 = vmatprep.subr.mxu0 0.0
    %1755 = vmatpush1.xpose.msra.mxu0 0.0
    %1756 = vmatprep.subr.mxu0 0.0
    %1757 = vmatpush1.xpose.msra.mxu0 0.0
    %1758 = vmatprep.subr.mxu0 0.0
    %1759 = vmatpush1.xpose.msra.mxu0 0.0
    %1760 = vmatprep.subr.mxu0 0.0
    %1761 = vmatpush1.xpose.msra.mxu0 0.0
    %1762 = vmatprep.subr.mxu0 0.0
    %1763 = vmatpush1.xpose.msra.mxu0 0.0
    %1764 = vmatprep.subr.mxu0 0.0
    %1765 = vmatpush1.xpose.msra.mxu0 0.0
    %1766 = vmatprep.subr.mxu0 0.0
    %1767 = vmatpush1.xpose.msra.mxu0 0.0
    %1768 = vmatprep.subr.mxu0 0.0
    %1769 = vmatpush1.xpose.msra.mxu0 0.0
    %1770 = vmatprep.subr.mxu0 0.0
    %1771 = vmatpush1.xpose.msra.mxu0 0.0
    %1772 = vmatprep.subr.mxu0 0.0
    %1773 = vmatpush1.xpose.msra.mxu0 0.0
    %1774 = vmatprep.subr.mxu0 0.0
    %1775 = vmatpush1.xpose.msra.mxu0 0.0
    %1776 = vmatprep.subr.mxu0 0.0
    %1777 = vmatpush1.xpose.msra.mxu0 0.0
    %1778 = vmatprep.subr.mxu0 0.0
    %1779 = vmatpush1.xpose.msra.mxu0 0.0
    %1780 = vmatprep.subr.mxu0 0.0
    %1781 = vmatpush1.xpose.msra.mxu0 0.0
    %1782 = vmatprep.subr.mxu0 0.0
    %1783 = vmatpush1.xpose.msra.mxu0 0.0
    %1784 = vmatprep.subr.mxu0 0.0
    %1785 = vmatpush1.xpose.msra.mxu0 0.0
    %1786 = vmatprep.subr.mxu0 0.0
    %1787 = vmatpush1.xpose.msra.mxu0 0.0
    %1788 = vmatprep.subr.mxu0 0.0
    %1789 = vmatpush1.xpose.msra.mxu0 0.0
    %1790 = vmatprep.subr.mxu0 0.0
    %1791 = vmatpush1.xpose.msra.mxu0 0.0
    %1792 = vmatprep.subr.mxu0 0.0
    %1793 = vmatpush1.xpose.msra.mxu0 0.0
    %1794 = vmatprep.subr.mxu0 0.0
    %1795 = vmatpush1.xpose.msra.mxu0 0.0
    %1796 = vmatprep.subr.mxu0 0.0
    %1797 = vmatpush1.xpose.msra.mxu0 0.0
    %1798 = vmatprep.subr.mxu0 0.0
    %1799 = vmatpush1.xpose.msra.mxu0 0.0
    %1800 = vmatprep.subr.mxu0 0.0
    %1801 = vmatpush1.xpose.msra.mxu0 0.0
    %1802 = vmatprep.subr.mxu0 0.0
    %1803 = vmatpush1.xpose.msra.mxu0 0.0
    %1804 = vmatprep.mubr.f32.mxu0 0.0
    %1805 = vmatmul.mubr.f32.gmra.mrb[0].mxu0 %v1735
    %v1806 = vpop.f32.mrb[0].mxu0
    %v1807 = vadd.f32 0.0, %v1806
    %v1808 = vpop.f32.mrb[0].mxu0
    %1809 = vdwg.mxu0
    %v1811 = vsel %vm1353, %v629, 0
    %v1814 = vsel %vm1353, %v1280, 0
    %1816 = vmatprep.subr.mxu0 0.0
    %1817 = vmatpush1.xpose.msra.mxu0 %v1814
    %1818 = vmatprep.subr.mxu0 0.0
    %1819 = vmatpush1.xpose.msra.mxu0 0.0
    %1820 = vmatprep.subr.mxu0 0.0
    %1821 = vmatpush1.xpose.msra.mxu0 0.0
    %1822 = vmatprep.subr.mxu0 0.0
    %1823 = vmatpush1.xpose.msra.mxu0 0.0
    %1824 = vmatprep.subr.mxu0 0.0
    %1825 = vmatpush1.xpose.msra.mxu0 0.0
    %1826 = vmatprep.subr.mxu0 0.0
    %1827 = vmatpush1.xpose.msra.mxu0 0.0
    %1828 = vmatprep.subr.mxu0 0.0
    %1829 = vmatpush1.xpose.msra.mxu0 0.0
    %1830 = vmatprep.subr.mxu0 0.0
    %1831 = vmatpush1.xpose.msra.mxu0 0.0
    %1832 = vmatprep.subr.mxu0 0.0
    %1833 = vmatpush1.xpose.msra.mxu0 0.0
    %1834 = vmatprep.subr.mxu0 0.0
    %1835 = vmatpush1.xpose.msra.mxu0 0.0
    %1836 = vmatprep.subr.mxu0 0.0
    %1837 = vmatpush1.xpose.msra.mxu0 0.0
    %1838 = vmatprep.subr.mxu0 0.0
    %1839 = vmatpush1.xpose.msra.mxu0 0.0
    %1840 = vmatprep.subr.mxu0 0.0
    %1841 = vmatpush1.xpose.msra.mxu0 0.0
    %1842 = vmatprep.subr.mxu0 0.0
    %1843 = vmatpush1.xpose.msra.mxu0 0.0
    %1844 = vmatprep.subr.mxu0 0.0
    %1845 = vmatpush1.xpose.msra.mxu0 0.0
    %1846 = vmatprep.subr.mxu0 0.0
    %1847 = vmatpush1.xpose.msra.mxu0 0.0
    %1848 = vmatprep.subr.mxu0 0.0
    %1849 = vmatpush1.xpose.msra.mxu0 0.0
    %1850 = vmatprep.subr.mxu0 0.0
    %1851 = vmatpush1.xpose.msra.mxu0 0.0
    %1852 = vmatprep.subr.mxu0 0.0
    %1853 = vmatpush1.xpose.msra.mxu0 0.0
    %1854 = vmatprep.subr.mxu0 0.0
    %1855 = vmatpush1.xpose.msra.mxu0 0.0
    %1856 = vmatprep.subr.mxu0 0.0
    %1857 = vmatpush1.xpose.msra.mxu0 0.0
    %1858 = vmatprep.subr.mxu0 0.0
    %1859 = vmatpush1.xpose.msra.mxu0 0.0
    %1860 = vmatprep.subr.mxu0 0.0
    %1861 = vmatpush1.xpose.msra.mxu0 0.0
    %1862 = vmatprep.subr.mxu0 0.0
    %1863 = vmatpush1.xpose.msra.mxu0 0.0
    %1864 = vmatprep.subr.mxu0 0.0
    %1865 = vmatpush1.xpose.msra.mxu0 0.0
    %1866 = vmatprep.subr.mxu0 0.0
    %1867 = vmatpush1.xpose.msra.mxu0 0.0
    %1868 = vmatprep.subr.mxu0 0.0
    %1869 = vmatpush1.xpose.msra.mxu0 0.0
    %1870 = vmatprep.subr.mxu0 0.0
    %1871 = vmatpush1.xpose.msra.mxu0 0.0
    %1872 = vmatprep.subr.mxu0 0.0
    %1873 = vmatpush1.xpose.msra.mxu0 0.0
    %1874 = vmatprep.subr.mxu0 0.0
    %1875 = vmatpush1.xpose.msra.mxu0 0.0
    %1876 = vmatprep.subr.mxu0 0.0
    %1877 = vmatpush1.xpose.msra.mxu0 0.0
    %1878 = vmatprep.subr.mxu0 0.0
    %1879 = vmatpush1.xpose.msra.mxu0 0.0
    %1880 = vmatprep.mubr.f32.mxu0 0.0
    %1881 = vmatmul.mubr.f32.gmra.mrb[0].mxu0 %v1811
    %v1882 = vpop.f32.mrb[0].mxu0
    %v1883 = vadd.f32 0.0, %v1882
    %v1884 = vpop.f32.mrb[0].mxu0
    %1885 = vdwg.mxu0
    %v1887 = vsel %vm1353, %v702, 0
    %v1890 = vsel %vm1353, %v1350, 0
    %1892 = vmatprep.subr.mxu0 0.0
    %1893 = vmatpush1.xpose.msra.mxu0 %v1890
    %1894 = vmatprep.subr.mxu0 0.0
    %1895 = vmatpush1.xpose.msra.mxu0 0.0
    %1896 = vmatprep.subr.mxu0 0.0
    %1897 = vmatpush1.xpose.msra.mxu0 0.0
    %1898 = vmatprep.subr.mxu0 0.0
    %1899 = vmatpush1.xpose.msra.mxu0 0.0
    %1900 = vmatprep.subr.mxu0 0.0
    %1901 = vmatpush1.xpose.msra.mxu0 0.0
    %1902 = vmatprep.subr.mxu0 0.0
    %1903 = vmatpush1.xpose.msra.mxu0 0.0
    %1904 = vmatprep.subr.mxu0 0.0
    %1905 = vmatpush1.xpose.msra.mxu0 0.0
    %1906 = vmatprep.subr.mxu0 0.0
    %1907 = vmatpush1.xpose.msra.mxu0 0.0
    %1908 = vmatprep.subr.mxu0 0.0
    %1909 = vmatpush1.xpose.msra.mxu0 0.0
    %1910 = vmatprep.subr.mxu0 0.0
    %1911 = vmatpush1.xpose.msra.mxu0 0.0
    %1912 = vmatprep.subr.mxu0 0.0
    %1913 = vmatpush1.xpose.msra.mxu0 0.0
    %1914 = vmatprep.subr.mxu0 0.0
    %1915 = vmatpush1.xpose.msra.mxu0 0.0
    %1916 = vmatprep.subr.mxu0 0.0
    %1917 = vmatpush1.xpose.msra.mxu0 0.0
    %1918 = vmatprep.subr.mxu0 0.0
    %1919 = vmatpush1.xpose.msra.mxu0 0.0
    %1920 = vmatprep.subr.mxu0 0.0
    %1921 = vmatpush1.xpose.msra.mxu0 0.0
    %1922 = vmatprep.subr.mxu0 0.0
    %1923 = vmatpush1.xpose.msra.mxu0 0.0
    %1924 = vmatprep.subr.mxu0 0.0
    %1925 = vmatpush1.xpose.msra.mxu0 0.0
    %1926 = vmatprep.subr.mxu0 0.0
    %1927 = vmatpush1.xpose.msra.mxu0 0.0
    %1928 = vmatprep.subr.mxu0 0.0
    %1929 = vmatpush1.xpose.msra.mxu0 0.0
    %1930 = vmatprep.subr.mxu0 0.0
    %1931 = vmatpush1.xpose.msra.mxu0 0.0
    %1932 = vmatprep.subr.mxu0 0.0
    %1933 = vmatpush1.xpose.msra.mxu0 0.0
    %1934 = vmatprep.subr.mxu0 0.0
    %1935 = vmatpush1.xpose.msra.mxu0 0.0
    %1936 = vmatprep.subr.mxu0 0.0
    %1937 = vmatpush1.xpose.msra.mxu0 0.0
    %1938 = vmatprep.subr.mxu0 0.0
    %1939 = vmatpush1.xpose.msra.mxu0 0.0
    %1940 = vmatprep.subr.mxu0 0.0
    %1941 = vmatpush1.xpose.msra.mxu0 0.0
    %1942 = vmatprep.subr.mxu0 0.0
    %1943 = vmatpush1.xpose.msra.mxu0 0.0
    %1944 = vmatprep.subr.mxu0 0.0
    %1945 = vmatpush1.xpose.msra.mxu0 0.0
    %1946 = vmatprep.subr.mxu0 0.0
    %1947 = vmatpush1.xpose.msra.mxu0 0.0
    %1948 = vmatprep.subr.mxu0 0.0
    %1949 = vmatpush1.xpose.msra.mxu0 0.0
    %1950 = vmatprep.subr.mxu0 0.0
    %1951 = vmatpush1.xpose.msra.mxu0 0.0
    %1952 = vmatprep.subr.mxu0 0.0
    %1953 = vmatpush1.xpose.msra.mxu0 0.0
    %1954 = vmatprep.subr.mxu0 0.0
    %1955 = vmatpush1.xpose.msra.mxu0 0.0
    %1956 = vmatprep.mubr.f32.mxu0 0.0
    %1957 = vmatmul.mubr.f32.gmra.mrb[0].mxu0 %v1887
    %v1958 = vpop.f32.mrb[0].mxu0
    %v1959 = vadd.f32 0.0, %v1958
    %v1960 = vpop.f32.mrb[0].mxu0
    %1961 = vdwg.mxu0
    %v1962 = vmul.f32 %v1427, 0.35355338
    %v1963 = vmul.f32 %v1503, 0.35355338
    %v1964 = vmul.f32 %v1579, 0.35355338
    %v1965 = vmul.f32 %v1655, 0.35355338
    %v1966 = vmul.f32 %v1731, 0.35355338
    %v1967 = vmul.f32 %v1807, 0.35355338
    %v1968 = vmul.f32 %v1883, 0.35355338
    %v1969 = vmul.f32 %v1959, 0.35355338
    %v1970 = vld [vmem:[%s5] sm:$0x1]
    %v1971 = vld [vmem:[%s5 + $0x1] sm:$0x1]
    %v1972 = vld [vmem:[%s5 + $0x2] sm:$0x1]
    %v1973 = vld [vmem:[%s5 + $0x3] sm:$0x1]
    %v1974 = vld [vmem:[%s5 + $0x4] sm:$0x1]
    %v1975 = vld [vmem:[%s5 + $0x5] sm:$0x1]
    %v1976 = vld [vmem:[%s5 + $0x6] sm:$0x1]
    %v1977 = vld [vmem:[%s5 + $0x7] sm:$0x1]
    %v1986 = vlaneseq
    %v1987 = vshrl.u32 %v1986, 7
    %v1988 = vsub.s32 0, %v1987
    %v1989 = vrot.slane %v1970, %v1988
    %v1990 = vlaneseq
    %v1991 = vshrl.u32 %v1990, 7
    %v1992 = vsub.s32 0, %v1991
    %v1993 = vrot.slane %v1971, %v1992
    %v1994 = vlaneseq
    %v1995 = vshrl.u32 %v1994, 7
    %v1996 = vsub.s32 0, %v1995
    %v1997 = vrot.slane %v1972, %v1996
    %v1998 = vlaneseq
    %v1999 = vshrl.u32 %v1998, 7
    %v2000 = vsub.s32 0, %v1999
    %v2001 = vrot.slane %v1973, %v2000
    %v2002 = vlaneseq
    %v2003 = vshrl.u32 %v2002, 7
    %v2004 = vsub.s32 0, %v2003
    %v2005 = vrot.slane %v1974, %v2004
    %v2006 = vlaneseq
    %v2007 = vshrl.u32 %v2006, 7
    %v2008 = vsub.s32 0, %v2007
    %v2009 = vrot.slane %v1975, %v2008
    %v2010 = vlaneseq
    %v2011 = vshrl.u32 %v2010, 7
    %v2012 = vsub.s32 0, %v2011
    %v2013 = vrot.slane %v1976, %v2012
    %v2014 = vlaneseq
    %v2015 = vshrl.u32 %v2014, 7
    %v2016 = vsub.s32 0, %v2015
    %v2017 = vrot.slane %v1977, %v2016
    %v2026 = vadd.f32 %v1962, %v1989
    %v2027 = vadd.f32 %v1963, %v1993
    %v2028 = vadd.f32 %v1964, %v1997
    %v2029 = vadd.f32 %v1965, %v2001
    %v2030 = vadd.f32 %v1966, %v2005
    %v2031 = vadd.f32 %v1967, %v2009
    %v2032 = vadd.f32 %v1968, %v2013
    %v2033 = vadd.f32 %v1969, %v2017
    %v2034 = vsel %vm1353, %v2026, -inf
    %2035 = vmax.xlane.f32.xlu0 %v2034
    %v2036 = vpop.xlane.xlu0 %2035
    %v2037 = vsel %vm1353, %v2027, -inf
    %2038 = vmax.xlane.f32.xlu0 %v2037
    %v2039 = vpop.xlane.xlu0 %2038
    %v2040 = vsel %vm1353, %v2028, -inf
    %2041 = vmax.xlane.f32.xlu0 %v2040
    %v2042 = vpop.xlane.xlu0 %2041
    %v2043 = vsel %vm1353, %v2029, -inf
    %2044 = vmax.xlane.f32.xlu0 %v2043
    %v2045 = vpop.xlane.xlu0 %2044
    %v2046 = vsel %vm1353, %v2030, -inf
    %2047 = vmax.xlane.f32.xlu0 %v2046
    %v2048 = vpop.xlane.xlu0 %2047
    %v2049 = vsel %vm1353, %v2031, -inf
    %2050 = vmax.xlane.f32.xlu0 %v2049
    %v2051 = vpop.xlane.xlu0 %2050
    %v2052 = vsel %vm1353, %v2032, -inf
    %2053 = vmax.xlane.f32.xlu0 %v2052
    %v2054 = vpop.xlane.xlu0 %2053
    %v2055 = vsel %vm1353, %v2033, -inf
    %2056 = vmax.xlane.f32.xlu0 %v2055
    %v2057 = vpop.xlane.xlu0 %2056
    %v2058 = vsub.f32 %v2026, %v2036
    %v2059 = vsub.f32 %v2027, %v2039
    %v2060 = vsub.f32 %v2028, %v2042
    %v2061 = vsub.f32 %v2029, %v2045
    %v2062 = vsub.f32 %v2030, %v2048
    %v2063 = vsub.f32 %v2031, %v2051
    %v2064 = vsub.f32 %v2032, %v2054
    %v2065 = vsub.f32 %v2033, %v2057
    %v2066 = vmul.f32 %v2058, 1.442695
    %v2067 = vpow.pop %v2066
    %v2068 = vmul.f32 %v2059, 1.442695
    %v2069 = vpow.pop %v2068
    %v2070 = vmul.f32 %v2060, 1.442695
    %v2071 = vpow.pop %v2070
    %v2072 = vmul.f32 %v2061, 1.442695
    %v2073 = vpow.pop %v2072
    %v2074 = vmul.f32 %v2062, 1.442695
    %v2075 = vpow.pop %v2074
    %v2076 = vmul.f32 %v2063, 1.442695
    %v2077 = vpow.pop %v2076
    %v2078 = vmul.f32 %v2064, 1.442695
    %v2079 = vpow.pop %v2078
    %v2080 = vmul.f32 %v2065, 1.442695
    %v2081 = vpow.pop %v2080
    %v2082 = vsel %vm1353, %v2067, 0.0
    %2083 = vadd.xlane.f32.xlu0 %v2082
    %v2084 = vpop.xlane.xlu0 %2083
    %v2085 = vsel %vm1353, %v2069, 0.0
    %2086 = vadd.xlane.f32.xlu0 %v2085
    %v2087 = vpop.xlane.xlu0 %2086
    %v2088 = vsel %vm1353, %v2071, 0.0
    %2089 = vadd.xlane.f32.xlu0 %v2088
    %v2090 = vpop.xlane.xlu0 %2089
    %v2091 = vsel %vm1353, %v2073, 0.0
    %2092 = vadd.xlane.f32.xlu0 %v2091
    %v2093 = vpop.xlane.xlu0 %2092
    %v2094 = vsel %vm1353, %v2075, 0.0
    %2095 = vadd.xlane.f32.xlu0 %v2094
    %v2096 = vpop.xlane.xlu0 %2095
    %v2097 = vsel %vm1353, %v2077, 0.0
    %2098 = vadd.xlane.f32.xlu0 %v2097
    %v2099 = vpop.xlane.xlu0 %2098
    %v2100 = vsel %vm1353, %v2079, 0.0
    %2101 = vadd.xlane.f32.xlu0 %v2100
    %v2102 = vpop.xlane.xlu0 %2101
    %v2103 = vsel %vm1353, %v2081, 0.0
    %2104 = vadd.xlane.f32.xlu0 %v2103
    %v2105 = vpop.xlane.xlu0 %2104
    %v2106 = vrcp.pop %v2084
    %v2107 = vrcp.pop %v2087
    %v2108 = vrcp.pop %v2090
    %v2109 = vrcp.pop %v2093
    %v2110 = vrcp.pop %v2096
    %v2111 = vrcp.pop %v2099
    %v2112 = vrcp.pop %v2102
    %v2113 = vrcp.pop %v2105
    %v2114 = vmul.f32 %v2084, %v2106
    %v2115 = vmul.f32 %v2087, %v2107
    %v2116 = vmul.f32 %v2090, %v2108
    %v2117 = vmul.f32 %v2093, %v2109
    %v2118 = vmul.f32 %v2096, %v2110
    %v2119 = vmul.f32 %v2099, %v2111
    %v2120 = vmul.f32 %v2102, %v2112
    %v2121 = vmul.f32 %v2105, %v2113
    %v2122 = vsub.f32 2.0, %v2114
    %v2123 = vsub.f32 2.0, %v2115
    %v2124 = vsub.f32 2.0, %v2116
    %v2125 = vsub.f32 2.0, %v2117
    %v2126 = vsub.f32 2.0, %v2118
    %v2127 = vsub.f32 2.0, %v2119
    %v2128 = vsub.f32 2.0, %v2120
    %v2129 = vsub.f32 2.0, %v2121
    %v2130 = vmul.f32 %v2106, %v2122
    %v2131 = vmul.f32 %v2107, %v2123
    %v2132 = vmul.f32 %v2108, %v2124
    %v2133 = vmul.f32 %v2109, %v2125
    %v2134 = vmul.f32 %v2110, %v2126
    %v2135 = vmul.f32 %v2111, %v2127
    %v2136 = vmul.f32 %v2112, %v2128
    %v2137 = vmul.f32 %v2113, %v2129
    %v2138 = vmul.f32 %v2067, %v2130
    %v2139 = vmul.f32 %v2069, %v2131
    %v2140 = vmul.f32 %v2071, %v2132
    %v2141 = vmul.f32 %v2073, %v2133
    %v2142 = vmul.f32 %v2075, %v2134
    %v2143 = vmul.f32 %v2077, %v2135
    %v2144 = vmul.f32 %v2079, %v2136
    %v2145 = vmul.f32 %v2081, %v2137
    %v2146 = vsel %vm1353, %v2138, 0.0
    %v2147 = vsel %vm1353, %v2139, 0.0
    %v2148 = vadd.f32 %v2146, %v2147
    %v2149 = vsel %vm1353, %v2140, 0.0
    %v2150 = vadd.f32 %v2148, %v2149
    %v2151 = vsel %vm1353, %v2141, 0.0
    %v2152 = vadd.f32 %v2150, %v2151
    %v2153 = vsel %vm1353, %v2142, 0.0
    %v2154 = vsel %vm1353, %v2143, 0.0
    %v2155 = vadd.f32 %v2153, %v2154
    %v2156 = vsel %vm1353, %v2144, 0.0
    %v2157 = vadd.f32 %v2155, %v2156
    %v2158 = vsel %vm1353, %v2145, 0.0
    %v2159 = vadd.f32 %v2157, %v2158
    %v2160 = vrcp.pop 4.0
    %v2161 = vmul.f32 %v2152, %v2160
    %v2162 = vmul.f32 %v2159, %v2160
    %2163 = vst.msk [vmem:[#allocation2] sm:$0xff] %vm1353, %v2161
    %2164 = vst.msk [vmem:[#allocation2 + $0x8] sm:$0xff] %vm1353, %v2162
    // Predicated region
    $region26: #{tpu_custom_call.1} parent=1 // pred_check
      _
    $region27: #{tpu_custom_call.1} parent=1 // pred_check_branch
      %2166 = sbr.rel (0) target = $region29
    $region28: #{tpu_custom_call.1} parent=1 // pred_region
      %s2168 = ssub.s32 256, 256
      %2169 = vsyncadd [#allocation3], %s2168
      %s2170 = sshll.u32 [#allocation2], 4
      %s2171 = int_to_ptr.vmem [resolvable:$true] %s2170
      %2176 = dma.vmem_to_hbm [thread:$0]  %s2171, 256, %s6, [#allocation3], 128, 128, 8
    $region29: #{tpu_custom_call.1} parent=1 // pred_fallthru
      _
    // Predicated region
    $region30: #{tpu_custom_call.1} parent=1 // pred_check
      _
    $region31: #{tpu_custom_call.1} parent=1 // pred_check_branch
      %2178 = sbr.rel (0) target = $region33
    $region32: #{tpu_custom_call.1} parent=1 // pred_region
      %2179 = dma.done [#allocation3], 256
    $region33: #{tpu_custom_call.1} parent=1 // pred_fallthru
      _
    %2180 = vsyncpa [#allocation3], 1

</llo_original>
